<compile_context>
chip_gen: v7x
topology: tpu7x:2x2x1
jax: 0.10.0
libtpu: 0.0.40
codegen_flags: <defaults>
</compile_context>

<pallas_src>
import functools

import jax
import jax.numpy as jnp
import numpy as np
from jax.experimental import pallas as pl
from jax.experimental.pallas import tpu as pltpu

# ---- dimensions from the PyTorch module ----
COL_IN, COL_H1, COL_H2, COL_OUT = 581, 290, 150, 70
ROW_IN, ROW_H, ROW_H1, ROW_OUT = 215, 120, 60, 70
COMB_IN, COMB_OUT = 70, 1


def _round_up(x, m):
    return (x + m - 1) // m * m


def _choose_batch_tile(B, block_b):
    """Batch tile: multiple of 16 (bf16 packing), <= block_b, and (for large B)
    an even number of >=2 grid steps so both v7x TensorCores get equal work."""
    cap = max(16, (block_b // 16) * 16)
    if B <= 16:
        # Single full block: block dim == array dim is always legal.
        return B
    n_min = pl.cdiv(B, cap)
    steps = 2 * ((n_min + 1) // 2)          # even step count, >= 2
    tb = _round_up(pl.cdiv(B, steps), 16)   # multiple of 16, always <= B here
    return min(cap, tb)


def _combine_kernel(xrow_ref, xcol_ref,
                    rw0_ref, rb0_ref, rw12_ref, rb12_ref,
                    cw0_ref, cb0_ref, cw1_ref, cb1_ref, cw2_ref, cb2_ref,
                    wcmb_ref, bcmb_ref,
                    out_ref):
    f32 = jnp.float32
    bf16 = jnp.bfloat16

    # ---- rowNet ----  (bf16 MXU operands cast in-kernel, f32 accum + f32 epilogue)
    h = jnp.dot(xrow_ref[...].astype(bf16), rw0_ref[...],
                preferred_element_type=f32) + rb0_ref[...]
    h = jnp.maximum(h, 0.0)                                        # ReLU
    # hid1Layer + hideLayer folded into one GEMM (no ReLU between them).
    h = jnp.dot(h.astype(bf16), rw12_ref[...],
                preferred_element_type=f32) + rb12_ref[...]
    out1 = jnp.maximum(h, 0.0)                                     # (TB, 70)

    # ---- colNet ----
    c = jnp.dot(xcol_ref[...].astype(bf16), cw0_ref[...],
                preferred_element_type=f32) + cb0_ref[...]
    c = jnp.maximum(c, 0.0)
    c = jnp.dot(c.astype(bf16), cw1_ref[...],
                preferred_element_type=f32) + cb1_ref[...]
    c = jnp.maximum(c, 0.0)
    c = jnp.dot(c.astype(bf16), cw2_ref[...],
                preferred_element_type=f32) + cb2_ref[...]
    out2 = jnp.maximum(c, 0.0)                                     # (TB, 70)

    # ---- combine ----
    # N=1 matmul done on the VPU/XLU (elementwise mul + lane reduce), MXU stays idle.
    comb = out1 * out2
    logit = jnp.sum(comb * wcmb_ref[...], axis=-1, keepdims=True) + bcmb_ref[...]
    out_ref[...] = jax.nn.sigmoid(logit)                           # (TB, 1)


def prepare_kernel_params(params):
    """Fold rowNet's hid1Layer into hideLayer and cast MXU operands to bf16."""
    (rw0, rb0, rw1, rb1, rw2, rb2,
     cw0, cb0, cw1, cb1, cw2, cb2,
     wcmb, bcmb) = params
    bf16 = jnp.bfloat16
    rw12 = rw1 @ rw2                 # (120, 70), folded in f32
    rb12 = rb1 @ rw2 + rb2           # (1, 70)
    wcmb_row = wcmb.T                # (1, 70) row for the VPU combine (kept f32)
    return (rw0.astype(bf16), rb0,
            rw12.astype(bf16), rb12,
            cw0.astype(bf16), cb0,
            cw1.astype(bf16), cb1,
            cw2.astype(bf16), cb2,
            wcmb_row, bcmb)


@functools.partial(jax.jit, static_argnames=("block_b",))
def combine_net_forward(x_row, x_col, params, *, block_b=2048):
    """Full combineNet forward: batch-tiled Pallas call with VMEM-resident weights."""
    B = x_row.shape[0]
    kparams = prepare_kernel_params(params)

    tb = _choose_batch_tile(B, block_b)
    grid = (pl.cdiv(B, tb),)   # partial edge block handled by Pallas (masked stores)

    def batch_map(i):
        return (i, 0)

    def const_map(i):
        return (0, 0)

    in_specs = [
        pl.BlockSpec((tb, ROW_IN), batch_map),
        pl.BlockSpec((tb, COL_IN), batch_map),
    ] + [pl.BlockSpec(p.shape, const_map) for p in kparams]

    out = pl.pallas_call(
        _combine_kernel,
        out_shape=jax.ShapeDtypeStruct((B, COMB_OUT), jnp.float32),
        grid=grid,
        in_specs=in_specs,
        out_specs=pl.BlockSpec((tb, COMB_OUT), batch_map),
        compiler_params=pltpu.CompilerParams(
            dimension_semantics=("parallel",),
            vmem_limit_bytes=48 * 1024 * 1024),
    )(x_row, x_col, *kparams)
    return out


def _linear_params(key, fan_in, fan_out):
    """Deterministic PyTorch-style uniform(-1/sqrt(fan_in), 1/sqrt(fan_in)) init."""
    kw, kb = jax.random.split(key)
    bound = 1.0 / np.sqrt(fan_in)
    w = jax.random.uniform(kw, (fan_in, fan_out), jnp.float32, -bound, bound)
    b = jax.random.uniform(kb, (1, fan_out), jnp.float32, -bound, bound)
    return w, b


def init_params(key):
    keys = jax.random.split(key, 7)
    rw0, rb0 = _linear_params(keys[0], ROW_IN, ROW_H)        # rowNet.InputLayer
    rw1, rb1 = _linear_params(keys[1], ROW_H, ROW_H1)        # rowNet.hid1Layer
    rw2, rb2 = _linear_params(keys[2], ROW_H1, ROW_OUT)      # rowNet.hideLayer
    cw0, cb0 = _linear_params(keys[3], COL_IN, COL_H1)       # colNet.InputLayer
    cw1, cb1 = _linear_params(keys[4], COL_H1, COL_H2)       # colNet.hide1Layer
    cw2, cb2 = _linear_params(keys[5], COL_H2, COL_OUT)      # colNet.hide2Layer
    wcmb, bcmb = _linear_params(keys[6], COMB_IN, COMB_OUT)  # combineNet.inputLayer
    return (rw0, rb0, rw1, rb1, rw2, rb2,
            cw0, cb0, cw1, cb1, cw2, cb2,
            wcmb, bcmb)


def reference_forward(x_row, x_col, params):
    """Pure-f32, unfolded reference (module semantics with the inserted hid1Layer)."""
    (rw0, rb0, rw1, rb1, rw2, rb2,
     cw0, cb0, cw1, cb1, cw2, cb2,
     wcmb, bcmb) = params
    h = jnp.maximum(x_row @ rw0 + rb0, 0.0)
    h = h @ rw1 + rb1
    out1 = jnp.maximum(h @ rw2 + rb2, 0.0)
    c = jnp.maximum(x_col @ cw0 + cb0, 0.0)
    c = jnp.maximum(c @ cw1 + cb1, 0.0)
    out2 = jnp.maximum(c @ cw2 + cb2, 0.0)
    comb = out1 * out2
    return jax.nn.sigmoid(comb @ wcmb + bcmb)


if __name__ == "__main__":
    key = jax.random.PRNGKey(0)
    k_row, k_col, k_row2, k_col2, k_params = jax.random.split(key, 5)
    params = init_params(k_params)

    # Small batch: single full block (tb == B), no edge masking.
    B = 8
    x_row = jax.random.normal(k_row, (B, ROW_IN), jnp.float32)
    x_col = jax.random.normal(k_col, (B, COL_IN), jnp.float32)
    out = jax.block_until_ready(combine_net_forward(x_row, x_col, params))
    ref = jax.block_until_ready(reference_forward(x_row, x_col, params))
    # bf16 MXU operands => compare to the f32 reference with relaxed tolerance.
    np.testing.assert_allclose(np.asarray(out), np.asarray(ref), rtol=2e-2, atol=2e-2)

    # Ragged batch: exercises the multi-step grid (2 tiles of 32, even step count
    # for v7x megacore) and the masked partial edge block (last tile has 5 rows).
    B2 = 37
    x_row2 = jax.random.normal(k_row2, (B2, ROW_IN), jnp.float32)
    x_col2 = jax.random.normal(k_col2, (B2, COL_IN), jnp.float32)
    out2 = jax.block_until_ready(combine_net_forward(x_row2, x_col2, params))
    ref2 = jax.block_until_ready(reference_forward(x_row2, x_col2, params))
    np.testing.assert_allclose(np.asarray(out2), np.asarray(ref2), rtol=2e-2, atol=2e-2)

    print("KERNEL_OK")
</pallas_src>

<mosaic_0001>
module attributes {stable_mosaic.version = 11 : i64} {
  func.func @_combine_kernel(%arg0: i32, %arg1: memref<8x215xf32, #tpu.memory_space<vmem>>, %arg2: memref<8x581xf32, #tpu.memory_space<vmem>>, %arg3: memref<215x120xbf16, #tpu.memory_space<vmem>>, %arg4: memref<1x120xf32, #tpu.memory_space<vmem>>, %arg5: memref<120x70xbf16, #tpu.memory_space<vmem>>, %arg6: memref<1x70xf32, #tpu.memory_space<vmem>>, %arg7: memref<581x290xbf16, #tpu.memory_space<vmem>>, %arg8: memref<1x290xf32, #tpu.memory_space<vmem>>, %arg9: memref<290x150xbf16, #tpu.memory_space<vmem>>, %arg10: memref<1x150xf32, #tpu.memory_space<vmem>>, %arg11: memref<150x70xbf16, #tpu.memory_space<vmem>>, %arg12: memref<1x70xf32, #tpu.memory_space<vmem>>, %arg13: memref<1x70xf32, #tpu.memory_space<vmem>>, %arg14: memref<1x1xf32, #tpu.memory_space<vmem>>, %arg15: memref<8x1xf32, #tpu.memory_space<vmem>>) attributes {dimension_semantics = [#tpu.dimension_semantics<parallel>], iteration_bounds = array<i64: 1>, scalar_prefetch = 0 : i64, scratch_operands = 0 : i64, tpu.core_type = #tpu.core_type<tc>, window_params = [{transform_indices = @transform_0, window_bounds = array<i64: 8, 215>}, {transform_indices = @transform_1, window_bounds = array<i64: 8, 581>}, {pipeline_mode = #tpu.pipeline_mode<synchronous>, transform_indices = @transform_2, window_bounds = array<i64: 215, 120>}, {pipeline_mode = #tpu.pipeline_mode<synchronous>, transform_indices = @transform_3, window_bounds = array<i64: 1, 120>}, {pipeline_mode = #tpu.pipeline_mode<synchronous>, transform_indices = @transform_4, window_bounds = array<i64: 120, 70>}, {pipeline_mode = #tpu.pipeline_mode<synchronous>, transform_indices = @transform_5, window_bounds = array<i64: 1, 70>}, {pipeline_mode = #tpu.pipeline_mode<synchronous>, transform_indices = @transform_6, window_bounds = array<i64: 581, 290>}, {pipeline_mode = #tpu.pipeline_mode<synchronous>, transform_indices = @transform_7, window_bounds = array<i64: 1, 290>}, {pipeline_mode = #tpu.pipeline_mode<synchronous>, transform_indices = @transform_8, window_bounds = array<i64: 290, 150>}, {pipeline_mode = #tpu.pipeline_mode<synchronous>, transform_indices = @transform_9, window_bounds = array<i64: 1, 150>}, {pipeline_mode = #tpu.pipeline_mode<synchronous>, transform_indices = @transform_10, window_bounds = array<i64: 150, 70>}, {pipeline_mode = #tpu.pipeline_mode<synchronous>, transform_indices = @transform_11, window_bounds = array<i64: 1, 70>}, {pipeline_mode = #tpu.pipeline_mode<synchronous>, transform_indices = @transform_12, window_bounds = array<i64: 1, 70>}, {pipeline_mode = #tpu.pipeline_mode<synchronous>, transform_indices = @transform_13, window_bounds = array<i64: 1, 1>}, {transform_indices = @transform_14, window_bounds = array<i64: 8, 1>}]} {
    %c0 = arith.constant 0 : index
    %c0_0 = arith.constant 0 : index
    %0 = vector.load %arg1[%c0, %c0_0] : memref<8x215xf32, #tpu.memory_space<vmem>>, vector<8x215xf32>
    %1 = arith.truncf %0 : vector<8x215xf32> to vector<8x215xbf16>
    %c0_1 = arith.constant 0 : index
    %c0_2 = arith.constant 0 : index
    %2 = vector.load %arg3[%c0_1, %c0_2] : memref<215x120xbf16, #tpu.memory_space<vmem>>, vector<215x120xbf16>
    %cst = arith.constant dense<0.000000e+00> : vector<8x120xf32>
    %3 = tpu.matmul %1, %2, %cst {dimension_numbers = #tpu.dot_dimension_numbers<[1], [0], [0], [1], [0, 0, 1, 1], [], []>} : vector<8x215xbf16>, vector<215x120xbf16>, vector<8x120xf32> -> vector<8x120xf32>
    %c0_3 = arith.constant 0 : index
    %c0_4 = arith.constant 0 : index
    %4 = vector.load %arg4[%c0_3, %c0_4] : memref<1x120xf32, #tpu.memory_space<vmem>>, vector<1x120xf32>
    %5 = vector.broadcast %4 : vector<1x120xf32> to vector<8x120xf32>
    %6 = arith.addf %3, %5 : vector<8x120xf32>
    %cst_5 = arith.constant 0.000000e+00 : f32
    %7 = vector.broadcast %cst_5 : f32 to vector<8x120xf32>
    %8 = arith.maximumf %6, %7 : vector<8x120xf32>
    %9 = arith.truncf %8 : vector<8x120xf32> to vector<8x120xbf16>
    %c0_6 = arith.constant 0 : index
    %c0_7 = arith.constant 0 : index
    %10 = vector.load %arg5[%c0_6, %c0_7] : memref<120x70xbf16, #tpu.memory_space<vmem>>, vector<120x70xbf16>
    %cst_8 = arith.constant dense<0.000000e+00> : vector<8x70xf32>
    %11 = tpu.matmul %9, %10, %cst_8 {dimension_numbers = #tpu.dot_dimension_numbers<[1], [0], [0], [1], [0, 0, 1, 1], [], []>} : vector<8x120xbf16>, vector<120x70xbf16>, vector<8x70xf32> -> vector<8x70xf32>
    %c0_9 = arith.constant 0 : index
    %c0_10 = arith.constant 0 : index
    %12 = vector.load %arg6[%c0_9, %c0_10] : memref<1x70xf32, #tpu.memory_space<vmem>>, vector<1x70xf32>
    %13 = vector.broadcast %12 : vector<1x70xf32> to vector<8x70xf32>
    %14 = arith.addf %11, %13 : vector<8x70xf32>
    %cst_11 = arith.constant 0.000000e+00 : f32
    %15 = vector.broadcast %cst_11 : f32 to vector<8x70xf32>
    %16 = arith.maximumf %14, %15 : vector<8x70xf32>
    %c0_12 = arith.constant 0 : index
    %c0_13 = arith.constant 0 : index
    %17 = vector.load %arg2[%c0_12, %c0_13] : memref<8x581xf32, #tpu.memory_space<vmem>>, vector<8x581xf32>
    %18 = arith.truncf %17 : vector<8x581xf32> to vector<8x581xbf16>
    %c0_14 = arith.constant 0 : index
    %c0_15 = arith.constant 0 : index
    %19 = vector.load %arg7[%c0_14, %c0_15] : memref<581x290xbf16, #tpu.memory_space<vmem>>, vector<581x290xbf16>
    %cst_16 = arith.constant dense<0.000000e+00> : vector<8x290xf32>
    %20 = tpu.matmul %18, %19, %cst_16 {dimension_numbers = #tpu.dot_dimension_numbers<[1], [0], [0], [1], [0, 0, 1, 1], [], []>} : vector<8x581xbf16>, vector<581x290xbf16>, vector<8x290xf32> -> vector<8x290xf32>
    %c0_17 = arith.constant 0 : index
    %c0_18 = arith.constant 0 : index
    %21 = vector.load %arg8[%c0_17, %c0_18] : memref<1x290xf32, #tpu.memory_space<vmem>>, vector<1x290xf32>
    %22 = vector.broadcast %21 : vector<1x290xf32> to vector<8x290xf32>
    %23 = arith.addf %20, %22 : vector<8x290xf32>
    %cst_19 = arith.constant 0.000000e+00 : f32
    %24 = vector.broadcast %cst_19 : f32 to vector<8x290xf32>
    %25 = arith.maximumf %23, %24 : vector<8x290xf32>
    %26 = arith.truncf %25 : vector<8x290xf32> to vector<8x290xbf16>
    %c0_20 = arith.constant 0 : index
    %c0_21 = arith.constant 0 : index
    %27 = vector.load %arg9[%c0_20, %c0_21] : memref<290x150xbf16, #tpu.memory_space<vmem>>, vector<290x150xbf16>
    %cst_22 = arith.constant dense<0.000000e+00> : vector<8x150xf32>
    %28 = tpu.matmul %26, %27, %cst_22 {dimension_numbers = #tpu.dot_dimension_numbers<[1], [0], [0], [1], [0, 0, 1, 1], [], []>} : vector<8x290xbf16>, vector<290x150xbf16>, vector<8x150xf32> -> vector<8x150xf32>
    %c0_23 = arith.constant 0 : index
    %c0_24 = arith.constant 0 : index
    %29 = vector.load %arg10[%c0_23, %c0_24] : memref<1x150xf32, #tpu.memory_space<vmem>>, vector<1x150xf32>
    %30 = vector.broadcast %29 : vector<1x150xf32> to vector<8x150xf32>
    %31 = arith.addf %28, %30 : vector<8x150xf32>
    %cst_25 = arith.constant 0.000000e+00 : f32
    %32 = vector.broadcast %cst_25 : f32 to vector<8x150xf32>
    %33 = arith.maximumf %31, %32 : vector<8x150xf32>
    %34 = arith.truncf %33 : vector<8x150xf32> to vector<8x150xbf16>
    %c0_26 = arith.constant 0 : index
    %c0_27 = arith.constant 0 : index
    %35 = vector.load %arg11[%c0_26, %c0_27] : memref<150x70xbf16, #tpu.memory_space<vmem>>, vector<150x70xbf16>
    %cst_28 = arith.constant dense<0.000000e+00> : vector<8x70xf32>
    %36 = tpu.matmul %34, %35, %cst_28 {dimension_numbers = #tpu.dot_dimension_numbers<[1], [0], [0], [1], [0, 0, 1, 1], [], []>} : vector<8x150xbf16>, vector<150x70xbf16>, vector<8x70xf32> -> vector<8x70xf32>
    %c0_29 = arith.constant 0 : index
    %c0_30 = arith.constant 0 : index
    %37 = vector.load %arg12[%c0_29, %c0_30] : memref<1x70xf32, #tpu.memory_space<vmem>>, vector<1x70xf32>
    %38 = vector.broadcast %37 : vector<1x70xf32> to vector<8x70xf32>
    %39 = arith.addf %36, %38 : vector<8x70xf32>
    %cst_31 = arith.constant 0.000000e+00 : f32
    %40 = vector.broadcast %cst_31 : f32 to vector<8x70xf32>
    %41 = arith.maximumf %39, %40 : vector<8x70xf32>
    %42 = arith.mulf %16, %41 : vector<8x70xf32>
    %c0_32 = arith.constant 0 : index
    %c0_33 = arith.constant 0 : index
    %43 = vector.load %arg13[%c0_32, %c0_33] : memref<1x70xf32, #tpu.memory_space<vmem>>, vector<1x70xf32>
    %44 = vector.broadcast %43 : vector<1x70xf32> to vector<8x70xf32>
    %45 = arith.mulf %42, %44 : vector<8x70xf32>
    %cst_34 = arith.constant dense<0.000000e+00> : vector<8xf32>
    %46 = vector.multi_reduction <add>, %45, %cst_34 [1] : vector<8x70xf32> to vector<8xf32>
    %47 = vector.shape_cast %46 : vector<8xf32> to vector<8x1xf32>
    %c0_35 = arith.constant 0 : index
    %c0_36 = arith.constant 0 : index
    %48 = vector.load %arg14[%c0_35, %c0_36] : memref<1x1xf32, #tpu.memory_space<vmem>>, vector<1x1xf32>
    %49 = vector.broadcast %48 : vector<1x1xf32> to vector<8x1xf32>
    %50 = arith.addf %47, %49 : vector<8x1xf32>
    %51 = arith.negf %50 : vector<8x1xf32>
    %52 = math.exp %51 : vector<8x1xf32>
    %cst_37 = arith.constant 1.000000e+00 : f32
    %53 = vector.broadcast %cst_37 : f32 to vector<8x1xf32>
    %54 = arith.addf %53, %52 : vector<8x1xf32>
    %55 = arith.divf %53, %54 : vector<8x1xf32>
    %c0_38 = arith.constant 0 : index
    %c0_39 = arith.constant 0 : index
    %56 = vector.load %arg15[%c0_38, %c0_39] : memref<8x1xf32, #tpu.memory_space<vmem>>, vector<8x1xf32>
    tpu.vector_store %arg15[%c0_38, %c0_39], %55 {strides = array<i32>} : memref<8x1xf32, #tpu.memory_space<vmem>>, vector<8x1xf32>,
    return
  }
  func.func @transform_0(%arg0: i32) -> (i32, i32) {
    %c0_i32 = arith.constant 0 : i32
    %c0_i32_0 = arith.constant 0 : i32
    return %arg0, %c0_i32 : i32, i32
  }
  func.func @transform_1(%arg0: i32) -> (i32, i32) {
    %c0_i32 = arith.constant 0 : i32
    %c0_i32_0 = arith.constant 0 : i32
    return %arg0, %c0_i32 : i32, i32
  }
  func.func @transform_2(%arg0: i32) -> (i32, i32) {
    %c0_i32 = arith.constant 0 : i32
    %c0_i32_0 = arith.constant 0 : i32
    %c0_i32_1 = arith.constant 0 : i32
    return %c0_i32, %c0_i32_0 : i32, i32
  }
  func.func @transform_3(%arg0: i32) -> (i32, i32) {
    %c0_i32 = arith.constant 0 : i32
    %c0_i32_0 = arith.constant 0 : i32
    %c0_i32_1 = arith.constant 0 : i32
    return %c0_i32, %c0_i32_0 : i32, i32
  }
  func.func @transform_4(%arg0: i32) -> (i32, i32) {
    %c0_i32 = arith.constant 0 : i32
    %c0_i32_0 = arith.constant 0 : i32
    %c0_i32_1 = arith.constant 0 : i32
    return %c0_i32, %c0_i32_0 : i32, i32
  }
  func.func @transform_5(%arg0: i32) -> (i32, i32) {
    %c0_i32 = arith.constant 0 : i32
    %c0_i32_0 = arith.constant 0 : i32
    %c0_i32_1 = arith.constant 0 : i32
    return %c0_i32, %c0_i32_0 : i32, i32
  }
  func.func @transform_6(%arg0: i32) -> (i32, i32) {
    %c0_i32 = arith.constant 0 : i32
    %c0_i32_0 = arith.constant 0 : i32
    %c0_i32_1 = arith.constant 0 : i32
    return %c0_i32, %c0_i32_0 : i32, i32
  }
  func.func @transform_7(%arg0: i32) -> (i32, i32) {
    %c0_i32 = arith.constant 0 : i32
    %c0_i32_0 = arith.constant 0 : i32
    %c0_i32_1 = arith.constant 0 : i32
    return %c0_i32, %c0_i32_0 : i32, i32
  }
  func.func @transform_8(%arg0: i32) -> (i32, i32) {
    %c0_i32 = arith.constant 0 : i32
    %c0_i32_0 = arith.constant 0 : i32
    %c0_i32_1 = arith.constant 0 : i32
    return %c0_i32, %c0_i32_0 : i32, i32
  }
  func.func @transform_9(%arg0: i32) -> (i32, i32) {
    %c0_i32 = arith.constant 0 : i32
    %c0_i32_0 = arith.constant 0 : i32
    %c0_i32_1 = arith.constant 0 : i32
    return %c0_i32, %c0_i32_0 : i32, i32
  }
  func.func @transform_10(%arg0: i32) -> (i32, i32) {
    %c0_i32 = arith.constant 0 : i32
    %c0_i32_0 = arith.constant 0 : i32
    %c0_i32_1 = arith.constant 0 : i32
    return %c0_i32, %c0_i32_0 : i32, i32
  }
  func.func @transform_11(%arg0: i32) -> (i32, i32) {
    %c0_i32 = arith.constant 0 : i32
    %c0_i32_0 = arith.constant 0 : i32
    %c0_i32_1 = arith.constant 0 : i32
    return %c0_i32, %c0_i32_0 : i32, i32
  }
  func.func @transform_12(%arg0: i32) -> (i32, i32) {
    %c0_i32 = arith.constant 0 : i32
    %c0_i32_0 = arith.constant 0 : i32
    %c0_i32_1 = arith.constant 0 : i32
    return %c0_i32, %c0_i32_0 : i32, i32
  }
  func.func @transform_13(%arg0: i32) -> (i32, i32) {
    %c0_i32 = arith.constant 0 : i32
    %c0_i32_0 = arith.constant 0 : i32
    %c0_i32_1 = arith.constant 0 : i32
    return %c0_i32, %c0_i32_0 : i32, i32
  }
  func.func @transform_14(%arg0: i32) -> (i32, i32) {
    %c0_i32 = arith.constant 0 : i32
    %c0_i32_0 = arith.constant 0 : i32
    return %arg0, %c0_i32 : i32, i32
  }
}

</mosaic_0001>

<llo_original>
// kernel: combine_net_forward.1
$region0: #{combine_net_forward.1}
  #allocation0 [shape = 'u32[]', space=smem, size = 0x4, offset = 0x4, fixed_abs, tag = 'smem constant byte address 0x4 - core index']
  #allocation1 [shape = 'u32[144,128]{1,0:T(1,128)}', space=vmem, size = 0x12000, scoped, tag = 'internal scratch']
  #allocation2 [shape = 'f32[1,1]{1,0:T(1,128)S(1)}', space=vmem, size = 0x200, scoped, tag = 'scoped memory for combine_net_forward.1']
  %s0 = inlined_call_operand.vmem [shape: f32[8,215], index: 0, kind: input, shape index: {}]
  %s1 = inlined_call_operand.vmem [shape: f32[8,581], index: 1, kind: input, shape index: {}]
  %s2 = inlined_call_operand.vmem [shape: bf16[215,120], index: 2, kind: input, shape index: {}]
  %s3 = inlined_call_operand.vmem [shape: f32[1,120], index: 3, kind: input, shape index: {}]
  %s4 = inlined_call_operand.vmem [shape: bf16[120,70], index: 4, kind: input, shape index: {}]
  %s5 = inlined_call_operand.vmem [shape: f32[1,70], index: 5, kind: input, shape index: {}]
  %s6 = inlined_call_operand.vmem [shape: bf16[581,290], index: 6, kind: input, shape index: {}]
  %s7 = inlined_call_operand.vmem [shape: f32[1,290], index: 7, kind: input, shape index: {}]
  %s8 = inlined_call_operand.vmem [shape: bf16[290,150], index: 8, kind: input, shape index: {}]
  %s9 = inlined_call_operand.vmem [shape: f32[1,150], index: 9, kind: input, shape index: {}]
  %s10 = inlined_call_operand.vmem [shape: bf16[150,70], index: 10, kind: input, shape index: {}]
  %s11 = inlined_call_operand.vmem [shape: f32[1,70], index: 11, kind: input, shape index: {}]
  %s12 = inlined_call_operand.vmem [shape: f32[1,70], index: 12, kind: input, shape index: {}]
  %s13 = inlined_call_operand.<no memory space> [shape: f32[1,1], index: 13, kind: input, shape index: {}]
  %s14 = inlined_call_operand.vmem [shape: f32[8,1], index: 14, kind: output, shape index: {}]
  %s15 = sld [smem:[#allocation0]]
  $region66: #{combine_net_forward.1} parent=0
    _
  %s17 = ssub.s32 1, %s15
  %s18 = scalar_select 0, %s17, %s15
  %v19 = vstv %s13
  %20 = vst [vmem:[#allocation2] sm:$0x1] %v19
  // Predicated region
  $region2: #{combine_net_forward.1} parent=0 // pred_check
    _
  $region3: #{combine_net_forward.1} parent=0 // pred_check_branch
    %22 = sbr.rel (0) target = $region5
  $region4: #{combine_net_forward.1} parent=0 // pred_region
    _
  $region5: #{combine_net_forward.1} parent=0 // pred_fallthru
    _
  // Predicated region
  $region6: #{combine_net_forward.1} parent=0 // pred_check
    _
  $region7: #{combine_net_forward.1} parent=0 // pred_check_branch
    %24 = sbr.rel (0) target = $region9
  $region8: #{combine_net_forward.1} parent=0 // pred_region
    _
  $region9: #{combine_net_forward.1} parent=0 // pred_fallthru
    _
  // Predicated region
  $region10: #{combine_net_forward.1} parent=0 // pred_check
    _
  $region11: #{combine_net_forward.1} parent=0 // pred_check_branch
    %26 = sbr.rel (0) target = $region13
  $region12: #{combine_net_forward.1} parent=0 // pred_region
    _
  $region13: #{combine_net_forward.1} parent=0 // pred_fallthru
    _
  // Predicated region
  $region14: #{combine_net_forward.1} parent=0 // pred_check
    _
  $region15: #{combine_net_forward.1} parent=0 // pred_check_branch
    %28 = sbr.rel (0) target = $region17
  $region16: #{combine_net_forward.1} parent=0 // pred_region
    _
  $region17: #{combine_net_forward.1} parent=0 // pred_fallthru
    _
  // Predicated region
  $region18: #{combine_net_forward.1} parent=0 // pred_check
    _
  $region19: #{combine_net_forward.1} parent=0 // pred_check_branch
    %30 = sbr.rel (0) target = $region21
  $region20: #{combine_net_forward.1} parent=0 // pred_region
    _
  $region21: #{combine_net_forward.1} parent=0 // pred_fallthru
    _
  // Predicated region
  $region22: #{combine_net_forward.1} parent=0 // pred_check
    _
  $region23: #{combine_net_forward.1} parent=0 // pred_check_branch
    %32 = sbr.rel (0) target = $region25
  $region24: #{combine_net_forward.1} parent=0 // pred_region
    _
  $region25: #{combine_net_forward.1} parent=0 // pred_fallthru
    _
  // Predicated region
  $region26: #{combine_net_forward.1} parent=0 // pred_check
    _
  $region27: #{combine_net_forward.1} parent=0 // pred_check_branch
    %34 = sbr.rel (0) target = $region29
  $region28: #{combine_net_forward.1} parent=0 // pred_region
    _
  $region29: #{combine_net_forward.1} parent=0 // pred_fallthru
    _
  // Predicated region
  $region30: #{combine_net_forward.1} parent=0 // pred_check
    _
  $region31: #{combine_net_forward.1} parent=0 // pred_check_branch
    %36 = sbr.rel (0) target = $region33
  $region32: #{combine_net_forward.1} parent=0 // pred_region
    _
  $region33: #{combine_net_forward.1} parent=0 // pred_fallthru
    _
  // Predicated region
  $region34: #{combine_net_forward.1} parent=0 // pred_check
    _
  $region35: #{combine_net_forward.1} parent=0 // pred_check_branch
    %38 = sbr.rel (0) target = $region37
  $region36: #{combine_net_forward.1} parent=0 // pred_region
    _
  $region37: #{combine_net_forward.1} parent=0 // pred_fallthru
    _
  // Predicated region
  $region38: #{combine_net_forward.1} parent=0 // pred_check
    _
  $region39: #{combine_net_forward.1} parent=0 // pred_check_branch
    %40 = sbr.rel (0) target = $region41
  $region40: #{combine_net_forward.1} parent=0 // pred_region
    _
  $region41: #{combine_net_forward.1} parent=0 // pred_fallthru
    _
  // Predicated region
  $region42: #{combine_net_forward.1} parent=0 // pred_check
    _
  $region43: #{combine_net_forward.1} parent=0 // pred_check_branch
    %42 = sbr.rel (0) target = $region45
  $region44: #{combine_net_forward.1} parent=0 // pred_region
    _
  $region45: #{combine_net_forward.1} parent=0 // pred_fallthru
    _
  // Predicated region
  $region46: #{combine_net_forward.1} parent=0 // pred_check
    _
  $region47: #{combine_net_forward.1} parent=0 // pred_check_branch
    %44 = sbr.rel (0) target = $region49
  $region48: #{combine_net_forward.1} parent=0 // pred_region
    _
  $region49: #{combine_net_forward.1} parent=0 // pred_fallthru
    _
  // Predicated region
  $region50: #{combine_net_forward.1} parent=0 // pred_check
    _
  $region51: #{combine_net_forward.1} parent=0 // pred_check_branch
    %46 = sbr.rel (0) target = $region53
  $region52: #{combine_net_forward.1} parent=0 // pred_region
    _
  $region53: #{combine_net_forward.1} parent=0 // pred_fallthru
    _
  // Predicated region
  $region54: #{combine_net_forward.1} parent=0 // pred_check
    _
  $region55: #{combine_net_forward.1} parent=0 // pred_check_branch
    %48 = sbr.rel (0) target = $region57
  $region56: #{combine_net_forward.1} parent=0 // pred_region
    _
  $region57: #{combine_net_forward.1} parent=0 // pred_fallthru
    _
  %v50 = vld [vmem:[%s0] sm:$0xff]
  %v51 = vld [vmem:[%s0 + $0x8] sm:$0xff]
  %v52 = vpack.c.bf16 %v50, %v50
  %v53 = vpack.c.bf16 %v51, %v51
  %v54 = vld [vmem:[%s2] sm:$0xf]
  %v55 = vld [vmem:[%s2 + $0x4] sm:$0xf]
  %v56 = vld [vmem:[%s2 + $0x8] sm:$0xf]
  %v57 = vld [vmem:[%s2 + $0xc] sm:$0xf]
  %v58 = vld [vmem:[%s2 + $0x10] sm:$0xf]
  %v59 = vld [vmem:[%s2 + $0x14] sm:$0xf]
  %v60 = vld [vmem:[%s2 + $0x18] sm:$0xf]
  %v61 = vld [vmem:[%s2 + $0x1c] sm:$0xf]
  %v62 = vld [vmem:[%s2 + $0x20] sm:$0xf]
  %v63 = vld [vmem:[%s2 + $0x24] sm:$0xf]
  %v64 = vld [vmem:[%s2 + $0x28] sm:$0xf]
  %v65 = vld [vmem:[%s2 + $0x2c] sm:$0xf]
  %v66 = vld [vmem:[%s2 + $0x30] sm:$0xf]
  %v67 = vld [vmem:[%s2 + $0x34] sm:$0xf]
  %v68 = vld [vmem:[%s2 + $0x38] sm:$0xf]
  %v69 = vld [vmem:[%s2 + $0x3c] sm:$0xf]
  %v70 = vld [vmem:[%s2 + $0x40] sm:$0xf]
  %v71 = vld [vmem:[%s2 + $0x44] sm:$0xf]
  %v72 = vld [vmem:[%s2 + $0x48] sm:$0xf]
  %v73 = vld [vmem:[%s2 + $0x4c] sm:$0xf]
  %v74 = vld [vmem:[%s2 + $0x50] sm:$0xf]
  %v75 = vld [vmem:[%s2 + $0x54] sm:$0xf]
  %v76 = vld [vmem:[%s2 + $0x58] sm:$0xf]
  %v77 = vld [vmem:[%s2 + $0x5c] sm:$0xf]
  %v78 = vld [vmem:[%s2 + $0x60] sm:$0xf]
  %v79 = vld [vmem:[%s2 + $0x64] sm:$0xf]
  %v80 = vld [vmem:[%s2 + $0x68] sm:$0xf]
  %v81 = vld [vmem:[%s3] sm:$0x1]
  %v83 = vlaneseq
  %v84 = vshrl.u32 %v83, 7
  %v85 = vsub.s32 0, %v84
  %v86 = vrot.slane %v81, %v85
  %v115 = vunpack.c.l.b16 %v54
  %v116 = vunpack.c.l.b16 %v55
  %v117 = vunpack.c.l.b16 %v56
  %v118 = vunpack.c.l.b16 %v57
  %v119 = vunpack.c.l.b16 %v58
  %v120 = vunpack.c.l.b16 %v59
  %v121 = vunpack.c.l.b16 %v60
  %v122 = vunpack.c.l.b16 %v61
  %v123 = vunpack.c.l.b16 %v62
  %v124 = vunpack.c.l.b16 %v63
  %v125 = vunpack.c.l.b16 %v64
  %v126 = vunpack.c.l.b16 %v65
  %v127 = vunpack.c.l.b16 %v66
  %v128 = vunpack.c.l.b16 %v67
  %v129 = vunpack.c.l.b16 %v68
  %v130 = vunpack.c.l.b16 %v69
  %v131 = vunpack.c.l.b16 %v70
  %v132 = vunpack.c.l.b16 %v71
  %v133 = vunpack.c.l.b16 %v72
  %v134 = vunpack.c.l.b16 %v73
  %v135 = vunpack.c.l.b16 %v74
  %v136 = vunpack.c.l.b16 %v75
  %v137 = vunpack.c.l.b16 %v76
  %v138 = vunpack.c.l.b16 %v77
  %v139 = vunpack.c.l.b16 %v78
  %v140 = vunpack.c.l.b16 %v79
  %v141 = vunpack.c.l.b16 %v80
  %v142 = vpack.c.b16 %v116, %v115
  %v143 = vpack.c.b16 %v118, %v117
  %v144 = vpack.c.b16 %v120, %v119
  %v145 = vpack.c.b16 %v122, %v121
  %v146 = vpack.c.b16 %v124, %v123
  %v147 = vpack.c.b16 %v126, %v125
  %v148 = vpack.c.b16 %v128, %v127
  %v149 = vpack.c.b16 %v130, %v129
  %v150 = vpack.c.b16 %v132, %v131
  %v151 = vpack.c.b16 %v134, %v133
  %v152 = vpack.c.b16 %v136, %v135
  %v153 = vpack.c.b16 %v138, %v137
  %v154 = vpack.c.b16 %v140, %v139
  %v155 = vpack.c.b16 %v141, %v141
  %vm169 = vcmask 711680
  %v171 = vsel %vm169, %v53, 0
  %vm173 = vcmask 1042432
  %vm174 = vcmask 1043456
  %v175 = vsel %vm173, 4294967295, 65535
  %v176 = vsel %vm174, %v175, 0
  %v178 = vand.u32 %v155, %v176
  %180 = vmatprep.subr.bf16.mxu0 0
  %181 = vmatpush1.bf16.msra.mxu0 %v142
  %182 = vmatprep.subr.bf16.mxu0 0
  %183 = vmatpush1.bf16.msra.mxu0 %v143
  %184 = vmatprep.subr.bf16.mxu0 0
  %185 = vmatpush1.bf16.msra.mxu0 %v144
  %186 = vmatprep.subr.bf16.mxu0 0
  %187 = vmatpush1.bf16.msra.mxu0 %v145
  %188 = vmatprep.subr.bf16.mxu0 0
  %189 = vmatpush1.bf16.msra.mxu0 %v146
  %190 = vmatprep.subr.bf16.mxu0 0
  %191 = vmatpush1.bf16.msra.mxu0 %v147
  %192 = vmatprep.subr.bf16.mxu0 0
  %193 = vmatpush1.bf16.msra.mxu0 %v148
  %194 = vmatprep.subr.bf16.mxu0 0
  %195 = vmatpush1.bf16.msra.mxu0 %v149
  %196 = vmatprep.subr.bf16.mxu0 0
  %197 = vmatpush1.bf16.msra.mxu0 %v150
  %198 = vmatprep.subr.bf16.mxu0 0
  %199 = vmatpush1.bf16.msra.mxu0 %v151
  %200 = vmatprep.subr.bf16.mxu0 0
  %201 = vmatpush1.bf16.msra.mxu0 %v152
  %202 = vmatprep.subr.bf16.mxu0 0
  %203 = vmatpush1.bf16.msra.mxu0 %v153
  %204 = vmatprep.subr.bf16.mxu0 0
  %205 = vmatpush1.bf16.msra.mxu0 %v154
  %206 = vmatprep.subr.bf16.mxu0 0
  %207 = vmatpush1.bf16.msra.mxu0 %v178
  %208 = vmatprep.subr.bf16.mxu0 0
  %209 = vmatpush1.bf16.msra.mxu0 0
  %210 = vmatprep.subr.bf16.mxu0 0
  %211 = vmatpush1.bf16.msra.mxu0 0
  %212 = vmatprep.mubr.bf16.mxu0 %v171
  %213 = vmatmul.mubr.bf16.gmra.mrb[0].mxu0 %v52
  %v214 = vpop.f32.mrb[0].mxu0
  %v215 = vadd.f32 %v86, %v214
  %v216 = vpop.f32.mrb[0].mxu0
  %v217 = vpop.f32.mrb[0].mxu0
  %v218 = vpop.f32.mrb[0].mxu0
  %219 = vdwg.mxu0
  %v220 = vmax.f32 %v215, 0.0
  %v221 = vpack.c.bf16 %v220, %v220
  %v222 = vld [vmem:[%s4] sm:$0xf]
  %v223 = vld [vmem:[%s4 + $0x4] sm:$0xf]
  %v224 = vld [vmem:[%s4 + $0x8] sm:$0xf]
  %v225 = vld [vmem:[%s4 + $0xc] sm:$0xf]
  %v226 = vld [vmem:[%s4 + $0x10] sm:$0xf]
  %v227 = vld [vmem:[%s4 + $0x14] sm:$0xf]
  %v228 = vld [vmem:[%s4 + $0x18] sm:$0xf]
  %v229 = vld [vmem:[%s4 + $0x1c] sm:$0xf]
  %v230 = vld [vmem:[%s4 + $0x20] sm:$0xf]
  %v231 = vld [vmem:[%s4 + $0x24] sm:$0xf]
  %v232 = vld [vmem:[%s4 + $0x28] sm:$0xf]
  %v233 = vld [vmem:[%s4 + $0x2c] sm:$0xf]
  %v234 = vld [vmem:[%s4 + $0x30] sm:$0xf]
  %v235 = vld [vmem:[%s4 + $0x34] sm:$0xf]
  %v236 = vld [vmem:[%s4 + $0x38] sm:$0xf]
  %v237 = vld [vmem:[%s5] sm:$0x1]
  %v239 = vlaneseq
  %v240 = vshrl.u32 %v239, 7
  %v241 = vsub.s32 0, %v240
  %v242 = vrot.slane %v237, %v241
  %v259 = vunpack.c.l.b16 %v222
  %v260 = vunpack.c.l.b16 %v223
  %v261 = vunpack.c.l.b16 %v224
  %v262 = vunpack.c.l.b16 %v225
  %v263 = vunpack.c.l.b16 %v226
  %v264 = vunpack.c.l.b16 %v227
  %v265 = vunpack.c.l.b16 %v228
  %v266 = vunpack.c.l.b16 %v229
  %v267 = vunpack.c.l.b16 %v230
  %v268 = vunpack.c.l.b16 %v231
  %v269 = vunpack.c.l.b16 %v232
  %v270 = vunpack.c.l.b16 %v233
  %v271 = vunpack.c.l.b16 %v234
  %v272 = vunpack.c.l.b16 %v235
  %v273 = vunpack.c.l.b16 %v236
  %v274 = vpack.c.b16 %v260, %v259
  %v275 = vpack.c.b16 %v262, %v261
  %v276 = vpack.c.b16 %v264, %v263
  %v277 = vpack.c.b16 %v266, %v265
  %v278 = vpack.c.b16 %v268, %v267
  %v279 = vpack.c.b16 %v270, %v269
  %v280 = vpack.c.b16 %v272, %v271
  %v281 = vpack.c.b16 %v273, %v273
  %vm289 = vcmask 982016
  %v291 = vsel %vm289, %v221, 0
  %v294 = vsel %vm174, %v281, 0
  %296 = vmatprep.subr.bf16.mxu0 0
  %297 = vmatpush1.bf16.msra.mxu0 %v274
  %298 = vmatprep.subr.bf16.mxu0 0
  %299 = vmatpush1.bf16.msra.mxu0 %v275
  %300 = vmatprep.subr.bf16.mxu0 0
  %301 = vmatpush1.bf16.msra.mxu0 %v276
  %302 = vmatprep.subr.bf16.mxu0 0
  %303 = vmatpush1.bf16.msra.mxu0 %v277
  %304 = vmatprep.subr.bf16.mxu0 0
  %305 = vmatpush1.bf16.msra.mxu0 %v278
  %306 = vmatprep.subr.bf16.mxu0 0
  %307 = vmatpush1.bf16.msra.mxu0 %v279
  %308 = vmatprep.subr.bf16.mxu0 0
  %309 = vmatpush1.bf16.msra.mxu0 %v280
  %310 = vmatprep.subr.bf16.mxu0 0
  %311 = vmatpush1.bf16.msra.mxu0 %v294
  %312 = vmatprep.subr.bf16.mxu0 0
  %313 = vmatpush1.bf16.msra.mxu0 0
  %314 = vmatprep.subr.bf16.mxu0 0
  %315 = vmatpush1.bf16.msra.mxu0 0
  %316 = vmatprep.subr.bf16.mxu0 0
  %317 = vmatpush1.bf16.msra.mxu0 0
  %318 = vmatprep.subr.bf16.mxu0 0
  %319 = vmatpush1.bf16.msra.mxu0 0
  %320 = vmatprep.subr.bf16.mxu0 0
  %321 = vmatpush1.bf16.msra.mxu0 0
  %322 = vmatprep.subr.bf16.mxu0 0
  %323 = vmatpush1.bf16.msra.mxu0 0
  %324 = vmatprep.subr.bf16.mxu0 0
  %325 = vmatpush1.bf16.msra.mxu0 0
  %326 = vmatprep.subr.bf16.mxu0 0
  %327 = vmatpush1.bf16.msra.mxu0 0
  %328 = vmatprep.mubr.bf16.mxu0 0
  %329 = vmatmul.mubr.bf16.gmra.mrb[0].mxu0 %v291
  %v330 = vpop.f32.mrb[0].mxu0
  %v331 = vadd.f32 %v242, %v330
  %v332 = vpop.f32.mrb[0].mxu0
  %v333 = vpop.f32.mrb[0].mxu0
  %v334 = vpop.f32.mrb[0].mxu0
  %335 = vdwg.mxu0
  %v336 = vmax.f32 %v331, 0.0
  %v337 = vld [vmem:[%s1] sm:$0xff]
  %v338 = vld [vmem:[%s1 + $0x8] sm:$0xff]
  %v339 = vld [vmem:[%s1 + $0x10] sm:$0xff]
  %v340 = vld [vmem:[%s1 + $0x18] sm:$0xff]
  %v341 = vld [vmem:[%s1 + $0x20] sm:$0xff]
  %v342 = vpack.c.bf16 %v337, %v337
  %v343 = vpack.c.bf16 %v338, %v338
  %v344 = vpack.c.bf16 %v339, %v339
  %v345 = vpack.c.bf16 %v340, %v340
  %v346 = vpack.c.bf16 %v341, %v341
  %v347 = vld [vmem:[%s6] sm:$0xff]
  %v348 = vld [vmem:[%s6 + $0x8] sm:$0xf]
  %v349 = vld [vmem:[%s6 + $0xc] sm:$0xff]
  %v350 = vld [vmem:[%s6 + $0x14] sm:$0xf]
  %v351 = vld [vmem:[%s6 + $0x18] sm:$0xff]
  %v352 = vld [vmem:[%s6 + $0x20] sm:$0xf]
  %v353 = vld [vmem:[%s6 + $0x24] sm:$0xff]
  %v354 = vld [vmem:[%s6 + $0x2c] sm:$0xf]
  %v355 = vld [vmem:[%s6 + $0x30] sm:$0xff]
  %v356 = vld [vmem:[%s6 + $0x38] sm:$0xf]
  %v357 = vld [vmem:[%s6 + $0x3c] sm:$0xff]
  %v358 = vld [vmem:[%s6 + $0x44] sm:$0xf]
  %v359 = vld [vmem:[%s6 + $0x48] sm:$0xff]
  %v360 = vld [vmem:[%s6 + $0x50] sm:$0xf]
  %v361 = vld [vmem:[%s6 + $0x54] sm:$0xff]
  %v362 = vld [vmem:[%s6 + $0x5c] sm:$0xf]
  %v363 = vld [vmem:[%s6 + $0x60] sm:$0xff]
  %v364 = vld [vmem:[%s6 + $0x68] sm:$0xf]
  %v365 = vld [vmem:[%s6 + $0x6c] sm:$0xff]
  %v366 = vld [vmem:[%s6 + $0x74] sm:$0xf]
  %v367 = vld [vmem:[%s6 + $0x78] sm:$0xff]
  %v368 = vld [vmem:[%s6 + $0x80] sm:$0xf]
  %v369 = vld [vmem:[%s6 + $0x84] sm:$0xff]
  %v370 = vld [vmem:[%s6 + $0x8c] sm:$0xf]
  %v371 = vld [vmem:[%s6 + $0x90] sm:$0xff]
  %v372 = vld [vmem:[%s6 + $0x98] sm:$0xf]
  %v373 = vld [vmem:[%s6 + $0x9c] sm:$0xff]
  %v374 = vld [vmem:[%s6 + $0xa4] sm:$0xf]
  %v375 = vld [vmem:[%s6 + $0xa8] sm:$0xff]
  %v376 = vld [vmem:[%s6 + $0xb0] sm:$0xf]
  %v377 = vld [vmem:[%s6 + $0xb4] sm:$0xff]
  %v378 = vld [vmem:[%s6 + $0xbc] sm:$0xf]
  %v379 = vld [vmem:[%s6 + $0xc0] sm:$0xff]
  %v380 = vld [vmem:[%s6 + $0xc8] sm:$0xf]
  %v381 = vld [vmem:[%s6 + $0xcc] sm:$0xff]
  %v382 = vld [vmem:[%s6 + $0xd4] sm:$0xf]
  %v383 = vld [vmem:[%s6 + $0xd8] sm:$0xff]
  %v384 = vld [vmem:[%s6 + $0xe0] sm:$0xf]
  %v385 = vld [vmem:[%s6 + $0xe4] sm:$0xff]
  %v386 = vld [vmem:[%s6 + $0xec] sm:$0xf]
  %v387 = vld [vmem:[%s6 + $0xf0] sm:$0xff]
  %v388 = vld [vmem:[%s6 + $0xf8] sm:$0xf]
  %v389 = vld [vmem:[%s6 + $0xfc] sm:$0xff]
  %v390 = vld [vmem:[%s6 + $0x104] sm:$0xf]
  %v391 = vld [vmem:[%s6 + $0x108] sm:$0xff]
  %v392 = vld [vmem:[%s6 + $0x110] sm:$0xf]
  %v393 = vld [vmem:[%s6 + $0x114] sm:$0xff]
  %v394 = vld [vmem:[%s6 + $0x11c] sm:$0xf]
  %v395 = vld [vmem:[%s6 + $0x120] sm:$0xff]
  %v396 = vld [vmem:[%s6 + $0x128] sm:$0xf]
  %v397 = vld [vmem:[%s6 + $0x12c] sm:$0xff]
  %v398 = vld [vmem:[%s6 + $0x134] sm:$0xf]
  %v399 = vld [vmem:[%s6 + $0x138] sm:$0xff]
  %v400 = vld [vmem:[%s6 + $0x140] sm:$0xf]
  %v401 = vld [vmem:[%s6 + $0x144] sm:$0xff]
  %v402 = vld [vmem:[%s6 + $0x14c] sm:$0xf]
  %v403 = vld [vmem:[%s6 + $0x150] sm:$0xff]
  %v404 = vld [vmem:[%s6 + $0x158] sm:$0xf]
  %v405 = vld [vmem:[%s6 + $0x15c] sm:$0xff]
  %v406 = vld [vmem:[%s6 + $0x164] sm:$0xf]
  %v407 = vld [vmem:[%s6 + $0x168] sm:$0xff]
  %v408 = vld [vmem:[%s6 + $0x170] sm:$0xf]
  %v409 = vld [vmem:[%s6 + $0x174] sm:$0xff]
  %v410 = vld [vmem:[%s6 + $0x17c] sm:$0xf]
  %v411 = vld [vmem:[%s6 + $0x180] sm:$0xff]
  %v412 = vld [vmem:[%s6 + $0x188] sm:$0xf]
  %v413 = vld [vmem:[%s6 + $0x18c] sm:$0xff]
  %v414 = vld [vmem:[%s6 + $0x194] sm:$0xf]
  %v415 = vld [vmem:[%s6 + $0x198] sm:$0xff]
  %v416 = vld [vmem:[%s6 + $0x1a0] sm:$0xf]
  %v417 = vld [vmem:[%s6 + $0x1a4] sm:$0xff]
  %v418 = vld [vmem:[%s6 + $0x1ac] sm:$0xf]
  %v419 = vld [vmem:[%s6 + $0x1b0] sm:$0xff]
  %v420 = vld [vmem:[%s6 + $0x1b8] sm:$0xf]
  %v421 = vld [vmem:[%s6 + $0x1bc] sm:$0xff]
  %v422 = vld [vmem:[%s6 + $0x1c4] sm:$0xf]
  %v423 = vld [vmem:[%s6 + $0x1c8] sm:$0xff]
  %v424 = vld [vmem:[%s6 + $0x1d0] sm:$0xf]
  %v425 = vld [vmem:[%s6 + $0x1d4] sm:$0xff]
  %v426 = vld [vmem:[%s6 + $0x1dc] sm:$0xf]
  %v427 = vld [vmem:[%s6 + $0x1e0] sm:$0xff]
  %v428 = vld [vmem:[%s6 + $0x1e8] sm:$0xf]
  %v429 = vld [vmem:[%s6 + $0x1ec] sm:$0xff]
  %v430 = vld [vmem:[%s6 + $0x1f4] sm:$0xf]
  %v431 = vld [vmem:[%s6 + $0x1f8] sm:$0xff]
  %v432 = vld [vmem:[%s6 + $0x200] sm:$0xf]
  %v433 = vld [vmem:[%s6 + $0x204] sm:$0xff]
  %v434 = vld [vmem:[%s6 + $0x20c] sm:$0xf]
  %v435 = vld [vmem:[%s6 + $0x210] sm:$0xff]
  %v436 = vld [vmem:[%s6 + $0x218] sm:$0xf]
  %v437 = vld [vmem:[%s6 + $0x21c] sm:$0xff]
  %v438 = vld [vmem:[%s6 + $0x224] sm:$0xf]
  %v439 = vld [vmem:[%s6 + $0x228] sm:$0xff]
  %v440 = vld [vmem:[%s6 + $0x230] sm:$0xf]
  %v441 = vld [vmem:[%s6 + $0x234] sm:$0xff]
  %v442 = vld [vmem:[%s6 + $0x23c] sm:$0xf]
  %v443 = vld [vmem:[%s6 + $0x240] sm:$0xff]
  %v444 = vld [vmem:[%s6 + $0x248] sm:$0xf]
  %v445 = vld [vmem:[%s6 + $0x24c] sm:$0xff]
  %v446 = vld [vmem:[%s6 + $0x254] sm:$0xf]
  %v447 = vld [vmem:[%s6 + $0x258] sm:$0xff]
  %v448 = vld [vmem:[%s6 + $0x260] sm:$0xf]
  %v449 = vld [vmem:[%s6 + $0x264] sm:$0xff]
  %v450 = vld [vmem:[%s6 + $0x26c] sm:$0xf]
  %v451 = vld [vmem:[%s6 + $0x270] sm:$0xff]
  %v452 = vld [vmem:[%s6 + $0x278] sm:$0xf]
  %v453 = vld [vmem:[%s6 + $0x27c] sm:$0xff]
  %v454 = vld [vmem:[%s6 + $0x284] sm:$0xf]
  %v455 = vld [vmem:[%s6 + $0x288] sm:$0xff]
  %v456 = vld [vmem:[%s6 + $0x290] sm:$0xf]
  %v457 = vld [vmem:[%s6 + $0x294] sm:$0xff]
  %v458 = vld [vmem:[%s6 + $0x29c] sm:$0xf]
  %v459 = vld [vmem:[%s6 + $0x2a0] sm:$0xff]
  %v460 = vld [vmem:[%s6 + $0x2a8] sm:$0xf]
  %v461 = vld [vmem:[%s6 + $0x2ac] sm:$0xff]
  %v462 = vld [vmem:[%s6 + $0x2b4] sm:$0xf]
  %v463 = vld [vmem:[%s6 + $0x2b8] sm:$0xff]
  %v464 = vld [vmem:[%s6 + $0x2c0] sm:$0xf]
  %v465 = vld [vmem:[%s6 + $0x2c4] sm:$0xff]
  %v466 = vld [vmem:[%s6 + $0x2cc] sm:$0xf]
  %v467 = vld [vmem:[%s6 + $0x2d0] sm:$0xff]
  %v468 = vld [vmem:[%s6 + $0x2d8] sm:$0xf]
  %v469 = vld [vmem:[%s6 + $0x2dc] sm:$0xff]
  %v470 = vld [vmem:[%s6 + $0x2e4] sm:$0xf]
  %v471 = vld [vmem:[%s6 + $0x2e8] sm:$0xff]
  %v472 = vld [vmem:[%s6 + $0x2f0] sm:$0xf]
  %v473 = vld [vmem:[%s6 + $0x2f4] sm:$0xff]
  %v474 = vld [vmem:[%s6 + $0x2fc] sm:$0xf]
  %v475 = vld [vmem:[%s6 + $0x300] sm:$0xff]
  %v476 = vld [vmem:[%s6 + $0x308] sm:$0xf]
  %v477 = vld [vmem:[%s6 + $0x30c] sm:$0xff]
  %v478 = vld [vmem:[%s6 + $0x314] sm:$0xf]
  %v479 = vld [vmem:[%s6 + $0x318] sm:$0xff]
  %v480 = vld [vmem:[%s6 + $0x320] sm:$0xf]
  %v481 = vld [vmem:[%s6 + $0x324] sm:$0xff]
  %v482 = vld [vmem:[%s6 + $0x32c] sm:$0xf]
  %v483 = vld [vmem:[%s6 + $0x330] sm:$0xff]
  %v484 = vld [vmem:[%s6 + $0x338] sm:$0xf]
  %v485 = vld [vmem:[%s6 + $0x33c] sm:$0xff]
  %v486 = vld [vmem:[%s6 + $0x344] sm:$0xf]
  %v487 = vld [vmem:[%s6 + $0x348] sm:$0xff]
  %v488 = vld [vmem:[%s6 + $0x350] sm:$0xf]
  %v489 = vld [vmem:[%s6 + $0x354] sm:$0xff]
  %v490 = vld [vmem:[%s6 + $0x35c] sm:$0xf]
  %v491 = vld [vmem:[%s6 + $0x360] sm:$0x77]
  %v492 = vld [vmem:[%s6 + $0x368] sm:$0x7]
  %v493 = vld [vmem:[%s7] sm:$0x7]
  %v495 = vlaneseq
  %v496 = vshrl.u32 %v495, 7
  %v497 = vsub.s32 0, %v496
  %v498 = vrot.slane %v493, %v497
  %v499 = vlaneseq
  %v500 = vshrl.u32 %v499, 7
  %v501 = vsub.s32 1, %v500
  %v502 = vrot.slane %v493, %v501
  %v503 = vlaneseq
  %v504 = vshrl.u32 %v503, 7
  %v505 = vsub.s32 2, %v504
  %v506 = vrot.slane %v493, %v505
  %v656 = vunpack.c.l.b16 %v347
  %v657 = vunpack.c.h.b16 %v347
  %v658 = vunpack.c.l.b16 %v348
  %v659 = vunpack.c.l.b16 %v349
  %v660 = vunpack.c.h.b16 %v349
  %v661 = vunpack.c.l.b16 %v350
  %v662 = vunpack.c.l.b16 %v351
  %v663 = vunpack.c.h.b16 %v351
  %v664 = vunpack.c.l.b16 %v352
  %v665 = vunpack.c.l.b16 %v353
  %v666 = vunpack.c.h.b16 %v353
  %v667 = vunpack.c.l.b16 %v354
  %v668 = vunpack.c.l.b16 %v355
  %v669 = vunpack.c.h.b16 %v355
  %v670 = vunpack.c.l.b16 %v356
  %v671 = vunpack.c.l.b16 %v357
  %v672 = vunpack.c.h.b16 %v357
  %v673 = vunpack.c.l.b16 %v358
  %v674 = vunpack.c.l.b16 %v359
  %v675 = vunpack.c.h.b16 %v359
  %v676 = vunpack.c.l.b16 %v360
  %v677 = vunpack.c.l.b16 %v361
  %v678 = vunpack.c.h.b16 %v361
  %v679 = vunpack.c.l.b16 %v362
  %v680 = vunpack.c.l.b16 %v363
  %v681 = vunpack.c.h.b16 %v363
  %v682 = vunpack.c.l.b16 %v364
  %v683 = vunpack.c.l.b16 %v365
  %v684 = vunpack.c.h.b16 %v365
  %v685 = vunpack.c.l.b16 %v366
  %v686 = vunpack.c.l.b16 %v367
  %v687 = vunpack.c.h.b16 %v367
  %v688 = vunpack.c.l.b16 %v368
  %v689 = vunpack.c.l.b16 %v369
  %v690 = vunpack.c.h.b16 %v369
  %v691 = vunpack.c.l.b16 %v370
  %v692 = vunpack.c.l.b16 %v371
  %v693 = vunpack.c.h.b16 %v371
  %v694 = vunpack.c.l.b16 %v372
  %v695 = vunpack.c.l.b16 %v373
  %v696 = vunpack.c.h.b16 %v373
  %v697 = vunpack.c.l.b16 %v374
  %v698 = vunpack.c.l.b16 %v375
  %v699 = vunpack.c.h.b16 %v375
  %v700 = vunpack.c.l.b16 %v376
  %v701 = vunpack.c.l.b16 %v377
  %v702 = vunpack.c.h.b16 %v377
  %v703 = vunpack.c.l.b16 %v378
  %v704 = vunpack.c.l.b16 %v379
  %v705 = vunpack.c.h.b16 %v379
  %v706 = vunpack.c.l.b16 %v380
  %v707 = vunpack.c.l.b16 %v381
  %v708 = vunpack.c.h.b16 %v381
  %v709 = vunpack.c.l.b16 %v382
  %v710 = vunpack.c.l.b16 %v383
  %v711 = vunpack.c.h.b16 %v383
  %v712 = vunpack.c.l.b16 %v384
  %v713 = vunpack.c.l.b16 %v385
  %v714 = vunpack.c.h.b16 %v385
  %v715 = vunpack.c.l.b16 %v386
  %v716 = vunpack.c.l.b16 %v387
  %v717 = vunpack.c.h.b16 %v387
  %v718 = vunpack.c.l.b16 %v388
  %v719 = vunpack.c.l.b16 %v389
  %v720 = vunpack.c.h.b16 %v389
  %v721 = vunpack.c.l.b16 %v390
  %v722 = vunpack.c.l.b16 %v391
  %v723 = vunpack.c.h.b16 %v391
  %v724 = vunpack.c.l.b16 %v392
  %v725 = vunpack.c.l.b16 %v393
  %v726 = vunpack.c.h.b16 %v393
  %v727 = vunpack.c.l.b16 %v394
  %v728 = vunpack.c.l.b16 %v395
  %v729 = vunpack.c.h.b16 %v395
  %v730 = vunpack.c.l.b16 %v396
  %v731 = vunpack.c.l.b16 %v397
  %v732 = vunpack.c.h.b16 %v397
  %v733 = vunpack.c.l.b16 %v398
  %v734 = vunpack.c.l.b16 %v399
  %v735 = vunpack.c.h.b16 %v399
  %v736 = vunpack.c.l.b16 %v400
  %v737 = vunpack.c.l.b16 %v401
  %v738 = vunpack.c.h.b16 %v401
  %v739 = vunpack.c.l.b16 %v402
  %v740 = vunpack.c.l.b16 %v403
  %v741 = vunpack.c.h.b16 %v403
  %v742 = vunpack.c.l.b16 %v404
  %v743 = vunpack.c.l.b16 %v405
  %v744 = vunpack.c.h.b16 %v405
  %v745 = vunpack.c.l.b16 %v406
  %v746 = vunpack.c.l.b16 %v407
  %v747 = vunpack.c.h.b16 %v407
  %v748 = vunpack.c.l.b16 %v408
  %v749 = vunpack.c.l.b16 %v409
  %v750 = vunpack.c.h.b16 %v409
  %v751 = vunpack.c.l.b16 %v410
  %v752 = vunpack.c.l.b16 %v411
  %v753 = vunpack.c.h.b16 %v411
  %v754 = vunpack.c.l.b16 %v412
  %v755 = vunpack.c.l.b16 %v413
  %v756 = vunpack.c.h.b16 %v413
  %v757 = vunpack.c.l.b16 %v414
  %v758 = vunpack.c.l.b16 %v415
  %v759 = vunpack.c.h.b16 %v415
  %v760 = vunpack.c.l.b16 %v416
  %v761 = vunpack.c.l.b16 %v417
  %v762 = vunpack.c.h.b16 %v417
  %v763 = vunpack.c.l.b16 %v418
  %v764 = vunpack.c.l.b16 %v419
  %v765 = vunpack.c.h.b16 %v419
  %v766 = vunpack.c.l.b16 %v420
  %v767 = vunpack.c.l.b16 %v421
  %v768 = vunpack.c.h.b16 %v421
  %v769 = vunpack.c.l.b16 %v422
  %v770 = vunpack.c.l.b16 %v423
  %v771 = vunpack.c.h.b16 %v423
  %v772 = vunpack.c.l.b16 %v424
  %v773 = vunpack.c.l.b16 %v425
  %v774 = vunpack.c.h.b16 %v425
  %v775 = vunpack.c.l.b16 %v426
  %v776 = vunpack.c.l.b16 %v427
  %v777 = vunpack.c.h.b16 %v427
  %v778 = vunpack.c.l.b16 %v428
  %v779 = vunpack.c.l.b16 %v429
  %v780 = vunpack.c.h.b16 %v429
  %v781 = vunpack.c.l.b16 %v430
  %v782 = vunpack.c.l.b16 %v431
  %v783 = vunpack.c.h.b16 %v431
  %v784 = vunpack.c.l.b16 %v432
  %v785 = vunpack.c.l.b16 %v433
  %v786 = vunpack.c.h.b16 %v433
  %v787 = vunpack.c.l.b16 %v434
  %v788 = vunpack.c.l.b16 %v435
  %v789 = vunpack.c.h.b16 %v435
  %v790 = vunpack.c.l.b16 %v436
  %v791 = vunpack.c.l.b16 %v437
  %v792 = vunpack.c.h.b16 %v437
  %v793 = vunpack.c.l.b16 %v438
  %v794 = vunpack.c.l.b16 %v439
  %v795 = vunpack.c.h.b16 %v439
  %v796 = vunpack.c.l.b16 %v440
  %v797 = vunpack.c.l.b16 %v441
  %v798 = vunpack.c.h.b16 %v441
  %v799 = vunpack.c.l.b16 %v442
  %v800 = vunpack.c.l.b16 %v443
  %v801 = vunpack.c.h.b16 %v443
  %v802 = vunpack.c.l.b16 %v444
  %v803 = vunpack.c.l.b16 %v445
  %v804 = vunpack.c.h.b16 %v445
  %v805 = vunpack.c.l.b16 %v446
  %v806 = vunpack.c.l.b16 %v447
  %v807 = vunpack.c.h.b16 %v447
  %v808 = vunpack.c.l.b16 %v448
  %v809 = vunpack.c.l.b16 %v449
  %v810 = vunpack.c.h.b16 %v449
  %v811 = vunpack.c.l.b16 %v450
  %v812 = vunpack.c.l.b16 %v451
  %v813 = vunpack.c.h.b16 %v451
  %v814 = vunpack.c.l.b16 %v452
  %v815 = vunpack.c.l.b16 %v453
  %v816 = vunpack.c.h.b16 %v453
  %v817 = vunpack.c.l.b16 %v454
  %v818 = vunpack.c.l.b16 %v455
  %v819 = vunpack.c.h.b16 %v455
  %v820 = vunpack.c.l.b16 %v456
  %v821 = vunpack.c.l.b16 %v457
  %v822 = vunpack.c.h.b16 %v457
  %v823 = vunpack.c.l.b16 %v458
  %v824 = vunpack.c.l.b16 %v459
  %v825 = vunpack.c.h.b16 %v459
  %v826 = vunpack.c.l.b16 %v460
  %v827 = vunpack.c.l.b16 %v461
  %v828 = vunpack.c.h.b16 %v461
  %v829 = vunpack.c.l.b16 %v462
  %v830 = vunpack.c.l.b16 %v463
  %v831 = vunpack.c.h.b16 %v463
  %v832 = vunpack.c.l.b16 %v464
  %v833 = vunpack.c.l.b16 %v465
  %v834 = vunpack.c.h.b16 %v465
  %v835 = vunpack.c.l.b16 %v466
  %v836 = vunpack.c.l.b16 %v467
  %v837 = vunpack.c.h.b16 %v467
  %v838 = vunpack.c.l.b16 %v468
  %v839 = vunpack.c.l.b16 %v469
  %v840 = vunpack.c.h.b16 %v469
  %v841 = vunpack.c.l.b16 %v470
  %v842 = vunpack.c.l.b16 %v471
  %v843 = vunpack.c.h.b16 %v471
  %v844 = vunpack.c.l.b16 %v472
  %v845 = vunpack.c.l.b16 %v473
  %v846 = vunpack.c.h.b16 %v473
  %v847 = vunpack.c.l.b16 %v474
  %v848 = vunpack.c.l.b16 %v475
  %v849 = vunpack.c.h.b16 %v475
  %v850 = vunpack.c.l.b16 %v476
  %v851 = vunpack.c.l.b16 %v477
  %v852 = vunpack.c.h.b16 %v477
  %v853 = vunpack.c.l.b16 %v478
  %v854 = vunpack.c.l.b16 %v479
  %v855 = vunpack.c.h.b16 %v479
  %v856 = vunpack.c.l.b16 %v480
  %v857 = vunpack.c.l.b16 %v481
  %v858 = vunpack.c.h.b16 %v481
  %v859 = vunpack.c.l.b16 %v482
  %v860 = vunpack.c.l.b16 %v483
  %v861 = vunpack.c.h.b16 %v483
  %v862 = vunpack.c.l.b16 %v484
  %v863 = vunpack.c.l.b16 %v485
  %v864 = vunpack.c.h.b16 %v485
  %v865 = vunpack.c.l.b16 %v486
  %v866 = vunpack.c.l.b16 %v487
  %v867 = vunpack.c.h.b16 %v487
  %v868 = vunpack.c.l.b16 %v488
  %v869 = vunpack.c.l.b16 %v489
  %v870 = vunpack.c.h.b16 %v489
  %v871 = vunpack.c.l.b16 %v490
  %v872 = vunpack.c.l.b16 %v491
  %v873 = vunpack.c.h.b16 %v491
  %v874 = vunpack.c.l.b16 %v492
  %v875 = vpack.c.b16 %v659, %v656
  %v876 = vpack.c.b16 %v660, %v657
  %v877 = vpack.c.b16 %v661, %v658
  %v878 = vpack.c.b16 %v665, %v662
  %v879 = vpack.c.b16 %v666, %v663
  %v880 = vpack.c.b16 %v667, %v664
  %v881 = vpack.c.b16 %v671, %v668
  %v882 = vpack.c.b16 %v672, %v669
  %v883 = vpack.c.b16 %v673, %v670
  %v884 = vpack.c.b16 %v677, %v674
  %v885 = vpack.c.b16 %v678, %v675
  %v886 = vpack.c.b16 %v679, %v676
  %v887 = vpack.c.b16 %v683, %v680
  %v888 = vpack.c.b16 %v684, %v681
  %v889 = vpack.c.b16 %v685, %v682
  %v890 = vpack.c.b16 %v689, %v686
  %v891 = vpack.c.b16 %v690, %v687
  %v892 = vpack.c.b16 %v691, %v688
  %v893 = vpack.c.b16 %v695, %v692
  %v894 = vpack.c.b16 %v696, %v693
  %v895 = vpack.c.b16 %v697, %v694
  %v896 = vpack.c.b16 %v701, %v698
  %v897 = vpack.c.b16 %v702, %v699
  %v898 = vpack.c.b16 %v703, %v700
  %v899 = vpack.c.b16 %v707, %v704
  %v900 = vpack.c.b16 %v708, %v705
  %v901 = vpack.c.b16 %v709, %v706
  %v902 = vpack.c.b16 %v713, %v710
  %v903 = vpack.c.b16 %v714, %v711
  %v904 = vpack.c.b16 %v715, %v712
  %v905 = vpack.c.b16 %v719, %v716
  %v906 = vpack.c.b16 %v720, %v717
  %v907 = vpack.c.b16 %v721, %v718
  %v908 = vpack.c.b16 %v725, %v722
  %v909 = vpack.c.b16 %v726, %v723
  %v910 = vpack.c.b16 %v727, %v724
  %v911 = vpack.c.b16 %v731, %v728
  %v912 = vpack.c.b16 %v732, %v729
  %v913 = vpack.c.b16 %v733, %v730
  %v914 = vpack.c.b16 %v737, %v734
  %v915 = vpack.c.b16 %v738, %v735
  %v916 = vpack.c.b16 %v739, %v736
  %v917 = vpack.c.b16 %v743, %v740
  %v918 = vpack.c.b16 %v744, %v741
  %v919 = vpack.c.b16 %v745, %v742
  %v920 = vpack.c.b16 %v749, %v746
  %v921 = vpack.c.b16 %v750, %v747
  %v922 = vpack.c.b16 %v751, %v748
  %v923 = vpack.c.b16 %v755, %v752
  %v924 = vpack.c.b16 %v756, %v753
  %v925 = vpack.c.b16 %v757, %v754
  %v926 = vpack.c.b16 %v761, %v758
  %v927 = vpack.c.b16 %v762, %v759
  %v928 = vpack.c.b16 %v763, %v760
  %v929 = vpack.c.b16 %v767, %v764
  %v930 = vpack.c.b16 %v768, %v765
  %v931 = vpack.c.b16 %v769, %v766
  %v932 = vpack.c.b16 %v773, %v770
  %v933 = vpack.c.b16 %v774, %v771
  %v934 = vpack.c.b16 %v775, %v772
  %v935 = vpack.c.b16 %v779, %v776
  %v936 = vpack.c.b16 %v780, %v777
  %v937 = vpack.c.b16 %v781, %v778
  %v938 = vpack.c.b16 %v785, %v782
  %v939 = vpack.c.b16 %v786, %v783
  %v940 = vpack.c.b16 %v787, %v784
  %v941 = vpack.c.b16 %v791, %v788
  %v942 = vpack.c.b16 %v792, %v789
  %v943 = vpack.c.b16 %v793, %v790
  %v944 = vpack.c.b16 %v797, %v794
  %v945 = vpack.c.b16 %v798, %v795
  %v946 = vpack.c.b16 %v799, %v796
  %v947 = vpack.c.b16 %v803, %v800
  %v948 = vpack.c.b16 %v804, %v801
  %v949 = vpack.c.b16 %v805, %v802
  %v950 = vpack.c.b16 %v809, %v806
  %v951 = vpack.c.b16 %v810, %v807
  %v952 = vpack.c.b16 %v811, %v808
  %v953 = vpack.c.b16 %v815, %v812
  %v954 = vpack.c.b16 %v816, %v813
  %v955 = vpack.c.b16 %v817, %v814
  %v956 = vpack.c.b16 %v821, %v818
  %v957 = vpack.c.b16 %v822, %v819
  %v958 = vpack.c.b16 %v823, %v820
  %v959 = vpack.c.b16 %v827, %v824
  %v960 = vpack.c.b16 %v828, %v825
  %v961 = vpack.c.b16 %v829, %v826
  %v962 = vpack.c.b16 %v833, %v830
  %v963 = vpack.c.b16 %v834, %v831
  %v964 = vpack.c.b16 %v835, %v832
  %v965 = vpack.c.b16 %v839, %v836
  %v966 = vpack.c.b16 %v840, %v837
  %v967 = vpack.c.b16 %v841, %v838
  %v968 = vpack.c.b16 %v845, %v842
  %v969 = vpack.c.b16 %v846, %v843
  %v970 = vpack.c.b16 %v847, %v844
  %v971 = vpack.c.b16 %v851, %v848
  %v972 = vpack.c.b16 %v852, %v849
  %v973 = vpack.c.b16 %v853, %v850
  %v974 = vpack.c.b16 %v857, %v854
  %v975 = vpack.c.b16 %v858, %v855
  %v976 = vpack.c.b16 %v859, %v856
  %v977 = vpack.c.b16 %v863, %v860
  %v978 = vpack.c.b16 %v864, %v861
  %v979 = vpack.c.b16 %v865, %v862
  %v980 = vpack.c.b16 %v869, %v866
  %v981 = vpack.c.b16 %v870, %v867
  %v982 = vpack.c.b16 %v871, %v868
  %v983 = vpack.c.b16 %v872, %v872
  %v984 = vpack.c.b16 %v873, %v873
  %v985 = vpack.c.b16 %v874, %v874
  %vm1094 = vcmask 564224
  %v1096 = vsel %vm1094, %v346, 0
  %vm1098 = vcmask 1041408
  %v1099 = vsel %vm1098, 4294967295, 65535
  %v1100 = vsel %vm173, %v1099, 0
  %v1102 = vand.u32 %v983, %v1100
  %v1105 = vand.u32 %v984, %v1100
  %v1108 = vand.u32 %v985, %v1100
  %1110 = vmatprep.subr.bf16.mxu0 %v876
  %1111 = vmatpush1.bf16.msra.mxu0 %v875
  %1112 = vmatprep.subr.bf16.mxu0 %v879
  %1113 = vmatpush1.bf16.msra.mxu0 %v878
  %1114 = vmatprep.subr.bf16.mxu0 %v882
  %1115 = vmatpush1.bf16.msra.mxu0 %v881
  %1116 = vmatprep.subr.bf16.mxu0 %v885
  %1117 = vmatpush1.bf16.msra.mxu0 %v884
  %1118 = vmatprep.subr.bf16.mxu0 %v888
  %1119 = vmatpush1.bf16.msra.mxu0 %v887
  %1120 = vmatprep.subr.bf16.mxu0 %v891
  %1121 = vmatpush1.bf16.msra.mxu0 %v890
  %1122 = vmatprep.subr.bf16.mxu0 %v894
  %1123 = vmatpush1.bf16.msra.mxu0 %v893
  %1124 = vmatprep.subr.bf16.mxu0 %v897
  %1125 = vmatpush1.bf16.msra.mxu0 %v896
  %1126 = vmatprep.subr.bf16.mxu0 %v900
  %1127 = vmatpush1.bf16.msra.mxu0 %v899
  %1128 = vmatprep.subr.bf16.mxu0 %v903
  %1129 = vmatpush1.bf16.msra.mxu0 %v902
  %1130 = vmatprep.subr.bf16.mxu0 %v906
  %1131 = vmatpush1.bf16.msra.mxu0 %v905
  %1132 = vmatprep.subr.bf16.mxu0 %v909
  %1133 = vmatpush1.bf16.msra.mxu0 %v908
  %1134 = vmatprep.subr.bf16.mxu0 %v912
  %1135 = vmatpush1.bf16.msra.mxu0 %v911
  %1136 = vmatprep.subr.bf16.mxu0 %v915
  %1137 = vmatpush1.bf16.msra.mxu0 %v914
  %1138 = vmatprep.subr.bf16.mxu0 %v918
  %1139 = vmatpush1.bf16.msra.mxu0 %v917
  %1140 = vmatprep.subr.bf16.mxu0 %v921
  %1141 = vmatpush1.bf16.msra.mxu0 %v920
  %1142 = vmatprep.mubr.bf16.mxu0 %v343
  %1143 = vmatmul.mubr.bf16.gmra.mrb[0].mxu0 %v342
  %v1144 = vpop.f32.mrb[0].mxu0
  %v1145 = vadd.f32 %v498, %v1144
  %v1146 = vpop.f32.mrb[0].mxu0
  %v1147 = vadd.f32 %v502, %v1146
  %v1148 = vpop.f32.mrb[0].mxu0
  %v1149 = vpop.f32.mrb[0].mxu0
  %1150 = vdwg.mxu0
  %1151 = vmatprep.subr.bf16.mxu0 %v924
  %1152 = vmatpush1.bf16.msra.mxu0 %v923
  %1153 = vmatprep.subr.bf16.mxu0 %v927
  %1154 = vmatpush1.bf16.msra.mxu0 %v926
  %1155 = vmatprep.subr.bf16.mxu0 %v930
  %1156 = vmatpush1.bf16.msra.mxu0 %v929
  %1157 = vmatprep.subr.bf16.mxu0 %v933
  %1158 = vmatpush1.bf16.msra.mxu0 %v932
  %1159 = vmatprep.subr.bf16.mxu0 %v936
  %1160 = vmatpush1.bf16.msra.mxu0 %v935
  %1161 = vmatprep.subr.bf16.mxu0 %v939
  %1162 = vmatpush1.bf16.msra.mxu0 %v938
  %1163 = vmatprep.subr.bf16.mxu0 %v942
  %1164 = vmatpush1.bf16.msra.mxu0 %v941
  %1165 = vmatprep.subr.bf16.mxu0 %v945
  %1166 = vmatpush1.bf16.msra.mxu0 %v944
  %1167 = vmatprep.subr.bf16.mxu0 %v948
  %1168 = vmatpush1.bf16.msra.mxu0 %v947
  %1169 = vmatprep.subr.bf16.mxu0 %v951
  %1170 = vmatpush1.bf16.msra.mxu0 %v950
  %1171 = vmatprep.subr.bf16.mxu0 %v954
  %1172 = vmatpush1.bf16.msra.mxu0 %v953
  %1173 = vmatprep.subr.bf16.mxu0 %v957
  %1174 = vmatpush1.bf16.msra.mxu0 %v956
  %1175 = vmatprep.subr.bf16.mxu0 %v960
  %1176 = vmatpush1.bf16.msra.mxu0 %v959
  %1177 = vmatprep.subr.bf16.mxu0 %v963
  %1178 = vmatpush1.bf16.msra.mxu0 %v962
  %1179 = vmatprep.subr.bf16.mxu0 %v966
  %1180 = vmatpush1.bf16.msra.mxu0 %v965
  %1181 = vmatprep.subr.bf16.mxu0 %v969
  %1182 = vmatpush1.bf16.msra.mxu0 %v968
  %1183 = vmatprep.mubr.bf16.mxu0 %v345
  %1184 = vmatmul.mubr.bf16.gmra.mrb[0].mxu0 %v344
  %v1185 = vpop.f32.mrb[0].mxu0
  %v1186 = vadd.f32 %v1145, %v1185
  %v1187 = vpop.f32.mrb[0].mxu0
  %v1188 = vadd.f32 %v1147, %v1187
  %v1189 = vpop.f32.mrb[0].mxu0
  %v1190 = vpop.f32.mrb[0].mxu0
  %1191 = vdwg.mxu0
  %1192 = vmatprep.subr.bf16.mxu0 %v972
  %1193 = vmatpush1.bf16.msra.mxu0 %v971
  %1194 = vmatprep.subr.bf16.mxu0 %v975
  %1195 = vmatpush1.bf16.msra.mxu0 %v974
  %1196 = vmatprep.subr.bf16.mxu0 %v978
  %1197 = vmatpush1.bf16.msra.mxu0 %v977
  %1198 = vmatprep.subr.bf16.mxu0 %v981
  %1199 = vmatpush1.bf16.msra.mxu0 %v980
  %1200 = vmatprep.subr.bf16.mxu0 %v1105
  %1201 = vmatpush1.bf16.msra.mxu0 %v1102
  %1202 = vmatprep.subr.bf16.mxu0 0
  %1203 = vmatpush1.bf16.msra.mxu0 0
  %1204 = vmatprep.subr.bf16.mxu0 0
  %1205 = vmatpush1.bf16.msra.mxu0 0
  %1206 = vmatprep.subr.bf16.mxu0 0
  %1207 = vmatpush1.bf16.msra.mxu0 0
  %1208 = vmatprep.subr.bf16.mxu0 0
  %1209 = vmatpush1.bf16.msra.mxu0 0
  %1210 = vmatprep.subr.bf16.mxu0 0
  %1211 = vmatpush1.bf16.msra.mxu0 0
  %1212 = vmatprep.subr.bf16.mxu0 0
  %1213 = vmatpush1.bf16.msra.mxu0 0
  %1214 = vmatprep.subr.bf16.mxu0 0
  %1215 = vmatpush1.bf16.msra.mxu0 0
  %1216 = vmatprep.subr.bf16.mxu0 0
  %1217 = vmatpush1.bf16.msra.mxu0 0
  %1218 = vmatprep.subr.bf16.mxu0 0
  %1219 = vmatpush1.bf16.msra.mxu0 0
  %1220 = vmatprep.subr.bf16.mxu0 0
  %1221 = vmatpush1.bf16.msra.mxu0 0
  %1222 = vmatprep.subr.bf16.mxu0 0
  %1223 = vmatpush1.bf16.msra.mxu0 0
  %1224 = vmatprep.mubr.bf16.mxu0 0
  %1225 = vmatmul.mubr.bf16.gmra.mrb[0].mxu0 %v1096
  %v1226 = vpop.f32.mrb[0].mxu0
  %v1227 = vadd.f32 %v1186, %v1226
  %v1228 = vpop.f32.mrb[0].mxu0
  %v1229 = vadd.f32 %v1188, %v1228
  %v1230 = vpop.f32.mrb[0].mxu0
  %v1231 = vpop.f32.mrb[0].mxu0
  %1232 = vdwg.mxu0
  %1233 = vmatprep.subr.bf16.mxu0 0
  %1234 = vmatpush1.bf16.msra.mxu0 %v877
  %1235 = vmatprep.subr.bf16.mxu0 0
  %1236 = vmatpush1.bf16.msra.mxu0 %v880
  %1237 = vmatprep.subr.bf16.mxu0 0
  %1238 = vmatpush1.bf16.msra.mxu0 %v883
  %1239 = vmatprep.subr.bf16.mxu0 0
  %1240 = vmatpush1.bf16.msra.mxu0 %v886
  %1241 = vmatprep.subr.bf16.mxu0 0
  %1242 = vmatpush1.bf16.msra.mxu0 %v889
  %1243 = vmatprep.subr.bf16.mxu0 0
  %1244 = vmatpush1.bf16.msra.mxu0 %v892
  %1245 = vmatprep.subr.bf16.mxu0 0
  %1246 = vmatpush1.bf16.msra.mxu0 %v895
  %1247 = vmatprep.subr.bf16.mxu0 0
  %1248 = vmatpush1.bf16.msra.mxu0 %v898
  %1249 = vmatprep.subr.bf16.mxu0 0
  %1250 = vmatpush1.bf16.msra.mxu0 %v901
  %1251 = vmatprep.subr.bf16.mxu0 0
  %1252 = vmatpush1.bf16.msra.mxu0 %v904
  %1253 = vmatprep.subr.bf16.mxu0 0
  %1254 = vmatpush1.bf16.msra.mxu0 %v907
  %1255 = vmatprep.subr.bf16.mxu0 0
  %1256 = vmatpush1.bf16.msra.mxu0 %v910
  %1257 = vmatprep.subr.bf16.mxu0 0
  %1258 = vmatpush1.bf16.msra.mxu0 %v913
  %1259 = vmatprep.subr.bf16.mxu0 0
  %1260 = vmatpush1.bf16.msra.mxu0 %v916
  %1261 = vmatprep.subr.bf16.mxu0 0
  %1262 = vmatpush1.bf16.msra.mxu0 %v919
  %1263 = vmatprep.subr.bf16.mxu0 0
  %1264 = vmatpush1.bf16.msra.mxu0 %v922
  %1265 = vmatprep.mubr.bf16.mxu0 %v343
  %1266 = vmatmul.mubr.bf16.gmra.mrb[0].mxu0 %v342
  %v1267 = vpop.f32.mrb[0].mxu0
  %v1268 = vadd.f32 %v506, %v1267
  %v1269 = vpop.f32.mrb[0].mxu0
  %v1270 = vpop.f32.mrb[0].mxu0
  %v1271 = vpop.f32.mrb[0].mxu0
  %1272 = vdwg.mxu0
  %1273 = vmatprep.subr.bf16.mxu0 0
  %1274 = vmatpush1.bf16.msra.mxu0 %v925
  %1275 = vmatprep.subr.bf16.mxu0 0
  %1276 = vmatpush1.bf16.msra.mxu0 %v928
  %1277 = vmatprep.subr.bf16.mxu0 0
  %1278 = vmatpush1.bf16.msra.mxu0 %v931
  %1279 = vmatprep.subr.bf16.mxu0 0
  %1280 = vmatpush1.bf16.msra.mxu0 %v934
  %1281 = vmatprep.subr.bf16.mxu0 0
  %1282 = vmatpush1.bf16.msra.mxu0 %v937
  %1283 = vmatprep.subr.bf16.mxu0 0
  %1284 = vmatpush1.bf16.msra.mxu0 %v940
  %1285 = vmatprep.subr.bf16.mxu0 0
  %1286 = vmatpush1.bf16.msra.mxu0 %v943
  %1287 = vmatprep.subr.bf16.mxu0 0
  %1288 = vmatpush1.bf16.msra.mxu0 %v946
  %1289 = vmatprep.subr.bf16.mxu0 0
  %1290 = vmatpush1.bf16.msra.mxu0 %v949
  %1291 = vmatprep.subr.bf16.mxu0 0
  %1292 = vmatpush1.bf16.msra.mxu0 %v952
  %1293 = vmatprep.subr.bf16.mxu0 0
  %1294 = vmatpush1.bf16.msra.mxu0 %v955
  %1295 = vmatprep.subr.bf16.mxu0 0
  %1296 = vmatpush1.bf16.msra.mxu0 %v958
  %1297 = vmatprep.subr.bf16.mxu0 0
  %1298 = vmatpush1.bf16.msra.mxu0 %v961
  %1299 = vmatprep.subr.bf16.mxu0 0
  %1300 = vmatpush1.bf16.msra.mxu0 %v964
  %1301 = vmatprep.subr.bf16.mxu0 0
  %1302 = vmatpush1.bf16.msra.mxu0 %v967
  %1303 = vmatprep.subr.bf16.mxu0 0
  %1304 = vmatpush1.bf16.msra.mxu0 %v970
  %1305 = vmatprep.mubr.bf16.mxu0 %v345
  %1306 = vmatmul.mubr.bf16.gmra.mrb[0].mxu0 %v344
  %v1307 = vpop.f32.mrb[0].mxu0
  %v1308 = vadd.f32 %v1268, %v1307
  %v1309 = vpop.f32.mrb[0].mxu0
  %v1310 = vpop.f32.mrb[0].mxu0
  %v1311 = vpop.f32.mrb[0].mxu0
  %1312 = vdwg.mxu0
  %1313 = vmatprep.subr.bf16.mxu0 0
  %1314 = vmatpush1.bf16.msra.mxu0 %v973
  %1315 = vmatprep.subr.bf16.mxu0 0
  %1316 = vmatpush1.bf16.msra.mxu0 %v976
  %1317 = vmatprep.subr.bf16.mxu0 0
  %1318 = vmatpush1.bf16.msra.mxu0 %v979
  %1319 = vmatprep.subr.bf16.mxu0 0
  %1320 = vmatpush1.bf16.msra.mxu0 %v982
  %1321 = vmatprep.subr.bf16.mxu0 0
  %1322 = vmatpush1.bf16.msra.mxu0 %v1108
  %1323 = vmatprep.subr.bf16.mxu0 0
  %1324 = vmatpush1.bf16.msra.mxu0 0
  %1325 = vmatprep.subr.bf16.mxu0 0
  %1326 = vmatpush1.bf16.msra.mxu0 0
  %1327 = vmatprep.subr.bf16.mxu0 0
  %1328 = vmatpush1.bf16.msra.mxu0 0
  %1329 = vmatprep.subr.bf16.mxu0 0
  %1330 = vmatpush1.bf16.msra.mxu0 0
  %1331 = vmatprep.subr.bf16.mxu0 0
  %1332 = vmatpush1.bf16.msra.mxu0 0
  %1333 = vmatprep.subr.bf16.mxu0 0
  %1334 = vmatpush1.bf16.msra.mxu0 0
  %1335 = vmatprep.subr.bf16.mxu0 0
  %1336 = vmatpush1.bf16.msra.mxu0 0
  %1337 = vmatprep.subr.bf16.mxu0 0
  %1338 = vmatpush1.bf16.msra.mxu0 0
  %1339 = vmatprep.subr.bf16.mxu0 0
  %1340 = vmatpush1.bf16.msra.mxu0 0
  %1341 = vmatprep.subr.bf16.mxu0 0
  %1342 = vmatpush1.bf16.msra.mxu0 0
  %1343 = vmatprep.subr.bf16.mxu0 0
  %1344 = vmatpush1.bf16.msra.mxu0 0
  %1345 = vmatprep.mubr.bf16.mxu0 0
  %1346 = vmatmul.mubr.bf16.gmra.mrb[0].mxu0 %v1096
  %v1347 = vpop.f32.mrb[0].mxu0
  %v1348 = vadd.f32 %v1308, %v1347
  %v1349 = vpop.f32.mrb[0].mxu0
  %v1350 = vpop.f32.mrb[0].mxu0
  %v1351 = vpop.f32.mrb[0].mxu0
  %1352 = vdwg.mxu0
  %v1353 = vmax.f32 %v1227, 0.0
  %v1354 = vmax.f32 %v1229, 0.0
  %v1355 = vmax.f32 %v1348, 0.0
  %v1356 = vpack.c.bf16 %v1353, %v1353
  %v1357 = vpack.c.bf16 %v1354, %v1354
  %v1358 = vpack.c.bf16 %v1355, %v1355
  %v1359 = vld [vmem:[%s8] sm:$0xff]
  %v1360 = vld [vmem:[%s8 + $0x8] sm:$0xff]
  %v1361 = vld [vmem:[%s8 + $0x10] sm:$0xff]
  %v1362 = vld [vmem:[%s8 + $0x18] sm:$0xff]
  %v1363 = vld [vmem:[%s8 + $0x20] sm:$0xff]
  %v1364 = vld [vmem:[%s8 + $0x28] sm:$0xff]
  %v1365 = vld [vmem:[%s8 + $0x30] sm:$0xff]
  %v1366 = vld [vmem:[%s8 + $0x38] sm:$0xff]
  %v1367 = vld [vmem:[%s8 + $0x40] sm:$0xff]
  %v1368 = vld [vmem:[%s8 + $0x48] sm:$0xff]
  %v1369 = vld [vmem:[%s8 + $0x50] sm:$0xff]
  %v1370 = vld [vmem:[%s8 + $0x58] sm:$0xff]
  %v1371 = vld [vmem:[%s8 + $0x60] sm:$0xff]
  %v1372 = vld [vmem:[%s8 + $0x68] sm:$0xff]
  %v1373 = vld [vmem:[%s8 + $0x70] sm:$0xff]
  %v1374 = vld [vmem:[%s8 + $0x78] sm:$0xff]
  %v1375 = vld [vmem:[%s8 + $0x80] sm:$0xff]
  %v1376 = vld [vmem:[%s8 + $0x88] sm:$0xff]
  %v1377 = vld [vmem:[%s8 + $0x90] sm:$0xff]
  %v1378 = vld [vmem:[%s8 + $0x98] sm:$0xff]
  %v1379 = vld [vmem:[%s8 + $0xa0] sm:$0xff]
  %v1380 = vld [vmem:[%s8 + $0xa8] sm:$0xff]
  %v1381 = vld [vmem:[%s8 + $0xb0] sm:$0xff]
  %v1382 = vld [vmem:[%s8 + $0xb8] sm:$0xff]
  %v1383 = vld [vmem:[%s8 + $0xc0] sm:$0xff]
  %v1384 = vld [vmem:[%s8 + $0xc8] sm:$0xff]
  %v1385 = vld [vmem:[%s8 + $0xd0] sm:$0xff]
  %v1386 = vld [vmem:[%s8 + $0xd8] sm:$0xff]
  %v1387 = vld [vmem:[%s8 + $0xe0] sm:$0xff]
  %v1388 = vld [vmem:[%s8 + $0xe8] sm:$0xff]
  %v1389 = vld [vmem:[%s8 + $0xf0] sm:$0xff]
  %v1390 = vld [vmem:[%s8 + $0xf8] sm:$0xff]
  %v1391 = vld [vmem:[%s8 + $0x100] sm:$0xff]
  %v1392 = vld [vmem:[%s8 + $0x108] sm:$0xff]
  %v1393 = vld [vmem:[%s8 + $0x110] sm:$0xff]
  %v1394 = vld [vmem:[%s8 + $0x118] sm:$0xff]
  %v1395 = vld [vmem:[%s8 + $0x120] sm:$0x11]
  %v1396 = vld [vmem:[%s9] sm:$0x3]
  %v1398 = vlaneseq
  %v1399 = vshrl.u32 %v1398, 7
  %v1400 = vsub.s32 0, %v1399
  %v1401 = vrot.slane %v1396, %v1400
  %v1402 = vlaneseq
  %v1403 = vshrl.u32 %v1402, 7
  %v1404 = vsub.s32 1, %v1403
  %v1405 = vrot.slane %v1396, %v1404
  %v1445 = vunpack.c.l.b16 %v1359
  %v1446 = vunpack.c.h.b16 %v1359
  %v1447 = vunpack.c.l.b16 %v1360
  %v1448 = vunpack.c.h.b16 %v1360
  %v1449 = vunpack.c.l.b16 %v1361
  %v1450 = vunpack.c.h.b16 %v1361
  %v1451 = vunpack.c.l.b16 %v1362
  %v1452 = vunpack.c.h.b16 %v1362
  %v1453 = vunpack.c.l.b16 %v1363
  %v1454 = vunpack.c.h.b16 %v1363
  %v1455 = vunpack.c.l.b16 %v1364
  %v1456 = vunpack.c.h.b16 %v1364
  %v1457 = vunpack.c.l.b16 %v1365
  %v1458 = vunpack.c.h.b16 %v1365
  %v1459 = vunpack.c.l.b16 %v1366
  %v1460 = vunpack.c.h.b16 %v1366
  %v1461 = vunpack.c.l.b16 %v1367
  %v1462 = vunpack.c.h.b16 %v1367
  %v1463 = vunpack.c.l.b16 %v1368
  %v1464 = vunpack.c.h.b16 %v1368
  %v1465 = vunpack.c.l.b16 %v1369
  %v1466 = vunpack.c.h.b16 %v1369
  %v1467 = vunpack.c.l.b16 %v1370
  %v1468 = vunpack.c.h.b16 %v1370
  %v1469 = vunpack.c.l.b16 %v1371
  %v1470 = vunpack.c.h.b16 %v1371
  %v1471 = vunpack.c.l.b16 %v1372
  %v1472 = vunpack.c.h.b16 %v1372
  %v1473 = vunpack.c.l.b16 %v1373
  %v1474 = vunpack.c.h.b16 %v1373
  %v1475 = vunpack.c.l.b16 %v1374
  %v1476 = vunpack.c.h.b16 %v1374
  %v1477 = vunpack.c.l.b16 %v1375
  %v1478 = vunpack.c.h.b16 %v1375
  %v1479 = vunpack.c.l.b16 %v1376
  %v1480 = vunpack.c.h.b16 %v1376
  %v1481 = vunpack.c.l.b16 %v1377
  %v1482 = vunpack.c.h.b16 %v1377
  %v1483 = vunpack.c.l.b16 %v1378
  %v1484 = vunpack.c.h.b16 %v1378
  %v1485 = vunpack.c.l.b16 %v1379
  %v1486 = vunpack.c.h.b16 %v1379
  %v1487 = vunpack.c.l.b16 %v1380
  %v1488 = vunpack.c.h.b16 %v1380
  %v1489 = vunpack.c.l.b16 %v1381
  %v1490 = vunpack.c.h.b16 %v1381
  %v1491 = vunpack.c.l.b16 %v1382
  %v1492 = vunpack.c.h.b16 %v1382
  %v1493 = vunpack.c.l.b16 %v1383
  %v1494 = vunpack.c.h.b16 %v1383
  %v1495 = vunpack.c.l.b16 %v1384
  %v1496 = vunpack.c.h.b16 %v1384
  %v1497 = vunpack.c.l.b16 %v1385
  %v1498 = vunpack.c.h.b16 %v1385
  %v1499 = vunpack.c.l.b16 %v1386
  %v1500 = vunpack.c.h.b16 %v1386
  %v1501 = vunpack.c.l.b16 %v1387
  %v1502 = vunpack.c.h.b16 %v1387
  %v1503 = vunpack.c.l.b16 %v1388
  %v1504 = vunpack.c.h.b16 %v1388
  %v1505 = vunpack.c.l.b16 %v1389
  %v1506 = vunpack.c.h.b16 %v1389
  %v1507 = vunpack.c.l.b16 %v1390
  %v1508 = vunpack.c.h.b16 %v1390
  %v1509 = vunpack.c.l.b16 %v1391
  %v1510 = vunpack.c.h.b16 %v1391
  %v1511 = vunpack.c.l.b16 %v1392
  %v1512 = vunpack.c.h.b16 %v1392
  %v1513 = vunpack.c.l.b16 %v1393
  %v1514 = vunpack.c.h.b16 %v1393
  %v1515 = vunpack.c.l.b16 %v1394
  %v1516 = vunpack.c.h.b16 %v1394
  %v1517 = vunpack.c.l.b16 %v1395
  %v1518 = vunpack.c.h.b16 %v1395
  %v1519 = vpack.c.b16 %v1447, %v1445
  %v1520 = vpack.c.b16 %v1448, %v1446
  %v1521 = vpack.c.b16 %v1451, %v1449
  %v1522 = vpack.c.b16 %v1452, %v1450
  %v1523 = vpack.c.b16 %v1455, %v1453
  %v1524 = vpack.c.b16 %v1456, %v1454
  %v1525 = vpack.c.b16 %v1459, %v1457
  %v1526 = vpack.c.b16 %v1460, %v1458
  %v1527 = vpack.c.b16 %v1463, %v1461
  %v1528 = vpack.c.b16 %v1464, %v1462
  %v1529 = vpack.c.b16 %v1467, %v1465
  %v1530 = vpack.c.b16 %v1468, %v1466
  %v1531 = vpack.c.b16 %v1471, %v1469
  %v1532 = vpack.c.b16 %v1472, %v1470
  %v1533 = vpack.c.b16 %v1475, %v1473
  %v1534 = vpack.c.b16 %v1476, %v1474
  %v1535 = vpack.c.b16 %v1479, %v1477
  %v1536 = vpack.c.b16 %v1480, %v1478
  %v1537 = vpack.c.b16 %v1483, %v1481
  %v1538 = vpack.c.b16 %v1484, %v1482
  %v1539 = vpack.c.b16 %v1487, %v1485
  %v1540 = vpack.c.b16 %v1488, %v1486
  %v1541 = vpack.c.b16 %v1491, %v1489
  %v1542 = vpack.c.b16 %v1492, %v1490
  %v1543 = vpack.c.b16 %v1495, %v1493
  %v1544 = vpack.c.b16 %v1496, %v1494
  %v1545 = vpack.c.b16 %v1499, %v1497
  %v1546 = vpack.c.b16 %v1500, %v1498
  %v1547 = vpack.c.b16 %v1503, %v1501
  %v1548 = vpack.c.b16 %v1504, %v1502
  %v1549 = vpack.c.b16 %v1507, %v1505
  %v1550 = vpack.c.b16 %v1508, %v1506
  %v1551 = vpack.c.b16 %v1511, %v1509
  %v1552 = vpack.c.b16 %v1512, %v1510
  %v1553 = vpack.c.b16 %v1515, %v1513
  %v1554 = vpack.c.b16 %v1516, %v1514
  %v1555 = vpack.c.b16 %v1517, %v1517
  %v1556 = vpack.c.b16 %v1518, %v1518
  %vm1593 = vcmask 277504
  %v1595 = vsel %vm1593, %v1358, 0
  %vm1597 = vcmask 1040384
  %v1599 = vsel %vm1597, %v1555, 0
  %v1602 = vsel %vm1597, %v1556, 0
  %1604 = vmatprep.subr.bf16.mxu0 %v1520
  %1605 = vmatpush1.bf16.msra.mxu0 %v1519
  %1606 = vmatprep.subr.bf16.mxu0 %v1522
  %1607 = vmatpush1.bf16.msra.mxu0 %v1521
  %1608 = vmatprep.subr.bf16.mxu0 %v1524
  %1609 = vmatpush1.bf16.msra.mxu0 %v1523
  %1610 = vmatprep.subr.bf16.mxu0 %v1526
  %1611 = vmatpush1.bf16.msra.mxu0 %v1525
  %1612 = vmatprep.subr.bf16.mxu0 %v1528
  %1613 = vmatpush1.bf16.msra.mxu0 %v1527
  %1614 = vmatprep.subr.bf16.mxu0 %v1530
  %1615 = vmatpush1.bf16.msra.mxu0 %v1529
  %1616 = vmatprep.subr.bf16.mxu0 %v1532
  %1617 = vmatpush1.bf16.msra.mxu0 %v1531
  %1618 = vmatprep.subr.bf16.mxu0 %v1534
  %1619 = vmatpush1.bf16.msra.mxu0 %v1533
  %1620 = vmatprep.subr.bf16.mxu0 %v1536
  %1621 = vmatpush1.bf16.msra.mxu0 %v1535
  %1622 = vmatprep.subr.bf16.mxu0 %v1538
  %1623 = vmatpush1.bf16.msra.mxu0 %v1537
  %1624 = vmatprep.subr.bf16.mxu0 %v1540
  %1625 = vmatpush1.bf16.msra.mxu0 %v1539
  %1626 = vmatprep.subr.bf16.mxu0 %v1542
  %1627 = vmatpush1.bf16.msra.mxu0 %v1541
  %1628 = vmatprep.subr.bf16.mxu0 %v1544
  %1629 = vmatpush1.bf16.msra.mxu0 %v1543
  %1630 = vmatprep.subr.bf16.mxu0 %v1546
  %1631 = vmatpush1.bf16.msra.mxu0 %v1545
  %1632 = vmatprep.subr.bf16.mxu0 %v1548
  %1633 = vmatpush1.bf16.msra.mxu0 %v1547
  %1634 = vmatprep.subr.bf16.mxu0 %v1550
  %1635 = vmatpush1.bf16.msra.mxu0 %v1549
  %1636 = vmatprep.mubr.bf16.mxu0 %v1357
  %1637 = vmatmul.mubr.bf16.gmra.mrb[0].mxu0 %v1356
  %v1638 = vpop.f32.mrb[0].mxu0
  %v1639 = vadd.f32 %v1401, %v1638
  %v1640 = vpop.f32.mrb[0].mxu0
  %v1641 = vadd.f32 %v1405, %v1640
  %v1642 = vpop.f32.mrb[0].mxu0
  %v1643 = vpop.f32.mrb[0].mxu0
  %1644 = vdwg.mxu0
  %1645 = vmatprep.subr.bf16.mxu0 %v1552
  %1646 = vmatpush1.bf16.msra.mxu0 %v1551
  %1647 = vmatprep.subr.bf16.mxu0 %v1554
  %1648 = vmatpush1.bf16.msra.mxu0 %v1553
  %1649 = vmatprep.subr.bf16.mxu0 %v1602
  %1650 = vmatpush1.bf16.msra.mxu0 %v1599
  %1651 = vmatprep.subr.bf16.mxu0 0
  %1652 = vmatpush1.bf16.msra.mxu0 0
  %1653 = vmatprep.subr.bf16.mxu0 0
  %1654 = vmatpush1.bf16.msra.mxu0 0
  %1655 = vmatprep.subr.bf16.mxu0 0
  %1656 = vmatpush1.bf16.msra.mxu0 0
  %1657 = vmatprep.subr.bf16.mxu0 0
  %1658 = vmatpush1.bf16.msra.mxu0 0
  %1659 = vmatprep.subr.bf16.mxu0 0
  %1660 = vmatpush1.bf16.msra.mxu0 0
  %1661 = vmatprep.subr.bf16.mxu0 0
  %1662 = vmatpush1.bf16.msra.mxu0 0
  %1663 = vmatprep.subr.bf16.mxu0 0
  %1664 = vmatpush1.bf16.msra.mxu0 0
  %1665 = vmatprep.subr.bf16.mxu0 0
  %1666 = vmatpush1.bf16.msra.mxu0 0
  %1667 = vmatprep.subr.bf16.mxu0 0
  %1668 = vmatpush1.bf16.msra.mxu0 0
  %1669 = vmatprep.subr.bf16.mxu0 0
  %1670 = vmatpush1.bf16.msra.mxu0 0
  %1671 = vmatprep.subr.bf16.mxu0 0
  %1672 = vmatpush1.bf16.msra.mxu0 0
  %1673 = vmatprep.subr.bf16.mxu0 0
  %1674 = vmatpush1.bf16.msra.mxu0 0
  %1675 = vmatprep.subr.bf16.mxu0 0
  %1676 = vmatpush1.bf16.msra.mxu0 0
  %1677 = vmatprep.mubr.bf16.mxu0 0
  %1678 = vmatmul.mubr.bf16.gmra.mrb[0].mxu0 %v1595
  %v1679 = vpop.f32.mrb[0].mxu0
  %v1680 = vadd.f32 %v1639, %v1679
  %v1681 = vpop.f32.mrb[0].mxu0
  %v1682 = vadd.f32 %v1641, %v1681
  %v1683 = vpop.f32.mrb[0].mxu0
  %v1684 = vpop.f32.mrb[0].mxu0
  %1685 = vdwg.mxu0
  %v1686 = vmax.f32 %v1680, 0.0
  %v1687 = vmax.f32 %v1682, 0.0
  %v1688 = vpack.c.bf16 %v1686, %v1686
  %v1689 = vpack.c.bf16 %v1687, %v1687
  %v1690 = vld [vmem:[%s10] sm:$0xf]
  %v1691 = vld [vmem:[%s10 + $0x4] sm:$0xf]
  %v1692 = vld [vmem:[%s10 + $0x8] sm:$0xf]
  %v1693 = vld [vmem:[%s10 + $0xc] sm:$0xf]
  %v1694 = vld [vmem:[%s10 + $0x10] sm:$0xf]
  %v1695 = vld [vmem:[%s10 + $0x14] sm:$0xf]
  %v1696 = vld [vmem:[%s10 + $0x18] sm:$0xf]
  %v1697 = vld [vmem:[%s10 + $0x1c] sm:$0xf]
  %v1698 = vld [vmem:[%s10 + $0x20] sm:$0xf]
  %v1699 = vld [vmem:[%s10 + $0x24] sm:$0xf]
  %v1700 = vld [vmem:[%s10 + $0x28] sm:$0xf]
  %v1701 = vld [vmem:[%s10 + $0x2c] sm:$0xf]
  %v1702 = vld [vmem:[%s10 + $0x30] sm:$0xf]
  %v1703 = vld [vmem:[%s10 + $0x34] sm:$0xf]
  %v1704 = vld [vmem:[%s10 + $0x38] sm:$0xf]
  %v1705 = vld [vmem:[%s10 + $0x3c] sm:$0xf]
  %v1706 = vld [vmem:[%s10 + $0x40] sm:$0xf]
  %v1707 = vld [vmem:[%s10 + $0x44] sm:$0xf]
  %v1708 = vld [vmem:[%s10 + $0x48] sm:$0x7]
  %v1709 = vld [vmem:[%s11] sm:$0x1]
  %v1711 = vlaneseq
  %v1712 = vshrl.u32 %v1711, 7
  %v1713 = vsub.s32 0, %v1712
  %v1714 = vrot.slane %v1709, %v1713
  %v1735 = vunpack.c.l.b16 %v1690
  %v1736 = vunpack.c.l.b16 %v1691
  %v1737 = vunpack.c.l.b16 %v1692
  %v1738 = vunpack.c.l.b16 %v1693
  %v1739 = vunpack.c.l.b16 %v1694
  %v1740 = vunpack.c.l.b16 %v1695
  %v1741 = vunpack.c.l.b16 %v1696
  %v1742 = vunpack.c.l.b16 %v1697
  %v1743 = vunpack.c.l.b16 %v1698
  %v1744 = vunpack.c.l.b16 %v1699
  %v1745 = vunpack.c.l.b16 %v1700
  %v1746 = vunpack.c.l.b16 %v1701
  %v1747 = vunpack.c.l.b16 %v1702
  %v1748 = vunpack.c.l.b16 %v1703
  %v1749 = vunpack.c.l.b16 %v1704
  %v1750 = vunpack.c.l.b16 %v1705
  %v1751 = vunpack.c.l.b16 %v1706
  %v1752 = vunpack.c.l.b16 %v1707
  %v1753 = vunpack.c.l.b16 %v1708
  %v1754 = vpack.c.b16 %v1736, %v1735
  %v1755 = vpack.c.b16 %v1738, %v1737
  %v1756 = vpack.c.b16 %v1740, %v1739
  %v1757 = vpack.c.b16 %v1742, %v1741
  %v1758 = vpack.c.b16 %v1744, %v1743
  %v1759 = vpack.c.b16 %v1746, %v1745
  %v1760 = vpack.c.b16 %v1748, %v1747
  %v1761 = vpack.c.b16 %v1750, %v1749
  %v1762 = vpack.c.b16 %v1752, %v1751
  %v1763 = vpack.c.b16 %v1753, %v1753
  %vm1773 = vcmask 179200
  %v1775 = vsel %vm1773, %v1689, 0
  %v1778 = vsel %vm173, %v1763, 0
  %1780 = vmatprep.subr.bf16.mxu0 0
  %1781 = vmatpush1.bf16.msra.mxu0 %v1754
  %1782 = vmatprep.subr.bf16.mxu0 0
  %1783 = vmatpush1.bf16.msra.mxu0 %v1755
  %1784 = vmatprep.subr.bf16.mxu0 0
  %1785 = vmatpush1.bf16.msra.mxu0 %v1756
  %1786 = vmatprep.subr.bf16.mxu0 0
  %1787 = vmatpush1.bf16.msra.mxu0 %v1757
  %1788 = vmatprep.subr.bf16.mxu0 0
  %1789 = vmatpush1.bf16.msra.mxu0 %v1758
  %1790 = vmatprep.subr.bf16.mxu0 0
  %1791 = vmatpush1.bf16.msra.mxu0 %v1759
  %1792 = vmatprep.subr.bf16.mxu0 0
  %1793 = vmatpush1.bf16.msra.mxu0 %v1760
  %1794 = vmatprep.subr.bf16.mxu0 0
  %1795 = vmatpush1.bf16.msra.mxu0 %v1761
  %1796 = vmatprep.subr.bf16.mxu0 0
  %1797 = vmatpush1.bf16.msra.mxu0 %v1762
  %1798 = vmatprep.subr.bf16.mxu0 0
  %1799 = vmatpush1.bf16.msra.mxu0 %v1778
  %1800 = vmatprep.subr.bf16.mxu0 0
  %1801 = vmatpush1.bf16.msra.mxu0 0
  %1802 = vmatprep.subr.bf16.mxu0 0
  %1803 = vmatpush1.bf16.msra.mxu0 0
  %1804 = vmatprep.subr.bf16.mxu0 0
  %1805 = vmatpush1.bf16.msra.mxu0 0
  %1806 = vmatprep.subr.bf16.mxu0 0
  %1807 = vmatpush1.bf16.msra.mxu0 0
  %1808 = vmatprep.subr.bf16.mxu0 0
  %1809 = vmatpush1.bf16.msra.mxu0 0
  %1810 = vmatprep.subr.bf16.mxu0 0
  %1811 = vmatpush1.bf16.msra.mxu0 0
  %1812 = vmatprep.mubr.bf16.mxu0 %v1775
  %1813 = vmatmul.mubr.bf16.gmra.mrb[0].mxu0 %v1688
  %v1814 = vpop.f32.mrb[0].mxu0
  %v1815 = vadd.f32 %v1714, %v1814
  %v1816 = vpop.f32.mrb[0].mxu0
  %v1817 = vpop.f32.mrb[0].mxu0
  %v1818 = vpop.f32.mrb[0].mxu0
  %1819 = vdwg.mxu0
  %v1820 = vmax.f32 %v1815, 0.0
  %v1821 = vmul.f32 %v336, %v1820
  %v1822 = vld [vmem:[%s12] sm:$0x1]
  %v1824 = vlaneseq
  %v1825 = vshrl.u32 %v1824, 7
  %v1826 = vsub.s32 0, %v1825
  %v1827 = vrot.slane %v1822, %v1826
  %v1829 = vmul.f32 %v1821, %v1827
  %vm1830 = vcmask 572416
  %v1831 = vsel %vm1830, %v1829, 0.0
  %1832 = vadd.xlane.f32.xlu0 %v1831
  %v1833 = vpop.xlane.xlu0 %1832
  %v1834 = vld [vmem:[#allocation2] sm:$0x1]
  %v1836 = vlaneseq
  %v1837 = vshrl.u32 %v1836, 7
  %v1838 = vsub.s32 0, %v1837
  %v1839 = vrot.slane %v1834, %v1838
  %v1841 = vadd.f32 %v1833, %v1839
  %v1842 = vxor.u32 %v1841, 2147483648
  %v1843 = vmul.f32 %v1842, 1.442695
  %v1844 = vpow.pop %v1843
  %v1845 = vadd.f32 %v1844, 1.0
  %v1846 = vrcp.pop %v1845
  %v1847 = vmul.f32 1.0, %v1846
  %vm1848 = vcmask 7168
  %1849 = vst.msk [vmem:[%s14] sm:$0xff] %vm1848, %v1847
  // Predicated region
  $region58: #{combine_net_forward.1} parent=0 // pred_check
    _
  $region59: #{combine_net_forward.1} parent=0 // pred_check_branch
    %1851 = sbr.rel (0) target = $region61
  $region60: #{combine_net_forward.1} parent=0 // pred_region
    _
  $region61: #{combine_net_forward.1} parent=0 // pred_fallthru
    _
  // Predicated region
  $region62: #{combine_net_forward.1} parent=0 // pred_check
    _
  $region63: #{combine_net_forward.1} parent=0 // pred_check_branch
    %1853 = sbr.rel (0) target = $region65
  $region64: #{combine_net_forward.1} parent=0 // pred_region
    _
  $region65: #{combine_net_forward.1} parent=0 // pred_fallthru
    _

</llo_original>
